<compile_context>
chip_gen: v6e
topology: v6e:2x2x1
jax: 0.10.0
libtpu: 0.0.40
codegen_flags: <defaults>
</compile_context>

<pallas_src>
import functools

import jax
import jax.numpy as jnp
from jax.experimental import pallas as pl
from jax.experimental.pallas import tpu as pltpu


# ---------------------------------------------------------------------------
# Model configuration (synthetic, small)
# ---------------------------------------------------------------------------
SA_CONFIGS = [
    # mlp_layers[-1] includes the 3 centroid channels appended after the max,
    # exactly like the PyTorch module (mlp_conv outputs mlp_layers[-1] - 3).
    dict(n_out_point=16, n_sample=8, radius=0.4, mlp_layers=[6, 32, 35]),
    dict(n_out_point=4,  n_sample=8, radius=0.8, mlp_layers=[35, 64, 67]),
]
FINAL_MLP_LAYERS = [67, 128, 40]

LANE = 128  # TPU lane width


def _round_up(v, m):
    return -(-v // m) * m


def _pad_axis(a, axis, target):
    pad = target - a.shape[axis]
    if pad == 0:
        return a
    widths = [(0, 0)] * a.ndim
    widths[axis] = (0, pad)
    return jnp.pad(a, widths)


# ---------------------------------------------------------------------------
# Pallas kernel: pointwise MLP (1x1 conv) + bias + ReLU per layer, then max
# over the group axis.  Input rows are flattened as (G * K, 128); one grid
# step processes `tile_g` groups of K rows each and writes (tile_g, 128) with
# a single block-wide, lane-dense store.
# ---------------------------------------------------------------------------
def _make_mlp_max_kernel(n_layers, tile_g, k):
    def kernel(*refs):
        x_ref, *wb_refs, o_ref = refs
        h = x_ref[...]                                   # (tile_g * k, 128) f32
        for li in range(n_layers):
            w = wb_refs[2 * li][...]                     # (128, 128) bf16
            b = wb_refs[2 * li + 1][...]                 # (1, 128)   f32
            # bf16 x bf16 -> f32 accumulate: native MXU rate on all gens.
            h = jnp.dot(h.astype(jnp.bfloat16), w,
                        preferred_element_type=jnp.float32)
            h = jnp.maximum(h + b, 0.0)                  # conv1d(k=1) + ReLU
        # max over each group of k consecutive rows, stored in one shot.
        o_ref[...] = jnp.max(h.reshape(tile_g, k, h.shape[-1]), axis=1)
    return kernel


def _pick_tile_g(G, K):
    # v7x has two TensorCores; split the grid 2-way only once per-step work
    # clears the ~0.35us grid-step overhead (roughly >= 4096 rows per step)
    # and the half-tile stays (8,128)-legal.  At toy sizes: single step.
    # (Per-call working set here is KiB-scale, far below v7x's 32 MiB scoped
    #  VMEM default; re-derive this ceiling before scaling tile_g up.)
    if G % 2 == 0 and (G // 2) % 8 == 0 and (G // 2) * K >= 4096:
        return G // 2
    return G


def mlp_max_pallas(x_grouped, weights, biases):
    """x_grouped: (G, K, 128) f32 -> (G, 128) = max_K(MLP(x)), lane-padded."""
    G, K, C = x_grouped.shape
    assert C == LANE, C
    n_layers = len(weights)
    C_out_pad = weights[-1].shape[1]

    tile_g = _pick_tile_g(G, K)
    x2d = x_grouped.reshape(G * K, C)                    # glue reshape (plain JAX)

    in_specs = [pl.BlockSpec((tile_g * K, C), lambda i: (i, 0))]
    args = [x2d]
    for w, b in zip(weights, biases):
        # Grid-invariant operands (constant index_map).  TODO(synk): add
        # pipeline_mode=pl.Buffered(1) once weights are large enough for the
        # redundant double buffer to matter.
        in_specs.append(pl.BlockSpec(w.shape, lambda i: (0, 0)))
        in_specs.append(pl.BlockSpec(b.shape, lambda i: (0, 0)))
        args.extend([w, b])

    out_specs = pl.BlockSpec((tile_g, C_out_pad), lambda i: (i, 0))

    return pl.pallas_call(
        _make_mlp_max_kernel(n_layers, tile_g, K),
        out_shape=jax.ShapeDtypeStruct((G, C_out_pad), jnp.float32),
        grid=(G // tile_g,),
        in_specs=in_specs,
        out_specs=out_specs,
        compiler_params=pltpu.CompilerParams(dimension_semantics=("parallel",)),
    )(*args)


def mlp_max_ref(x_grouped, weights, biases):
    """Pure-JAX reference of the kernel (mirrors the bf16 matmul precision)."""
    G, K, C = x_grouped.shape
    h = x_grouped.reshape(G * K, C)
    for w, b in zip(weights, biases):
        h = jnp.dot(h.astype(jnp.bfloat16), w, preferred_element_type=jnp.float32)
        h = jnp.maximum(h + b, 0.0)
    return jnp.max(h.reshape(G, K, -1), axis=1)


# ---------------------------------------------------------------------------
# Plain-JAX glue: farthest point sampling + ball query + grouping
# ---------------------------------------------------------------------------
def farthest_point_sample(pos, n_sample):
    """pos: (B, N, 3) -> centroids (B, n_sample, 3). Start point fixed to 0."""
    def fps_single(p):
        n = p.shape[0]
        dists = jnp.full((n,), jnp.inf, dtype=p.dtype)
        idxs = jnp.zeros((n_sample,), dtype=jnp.int32)   # start index 0

        def body(i, carry):
            d_min, sel = carry
            last = p[sel[i - 1]]
            d = jnp.sum((p - last[None, :]) ** 2, axis=-1)
            d_min = jnp.minimum(d_min, d)
            sel = sel.at[i].set(jnp.argmax(d_min).astype(jnp.int32))
            return d_min, sel

        _, idxs = jax.lax.fori_loop(1, n_sample, body, (dists, idxs))
        return p[idxs]

    return jax.vmap(fps_single)(pos)


def ball_query(centroid, pos, k, radius):
    """First k indices of `pos` within `radius` of each centroid, -1 padded."""
    d2 = jnp.sum((centroid[:, :, None, :] - pos[:, None, :, :]) ** 2, axis=-1)
    n = pos.shape[1]
    mask = d2 < radius * radius
    rank = jnp.cumsum(mask.astype(jnp.int32), axis=-1) - 1
    valid = mask & (rank < k)
    cand = jnp.where(valid, jnp.arange(n, dtype=jnp.int32)[None, None, :], n)
    sel = jnp.sort(cand, axis=-1)[:, :, :k]
    return jnp.where(sel == n, -1, sel)


def set_abstraction_ssg(x_pad, weights, biases, cfg, mlp_fn):
    """x_pad: (B, N, 128) slab (lanes [0:3] = xyz) -> (B, S, 128) slab."""
    B, N, _ = x_pad.shape
    S, K, radius = cfg["n_out_point"], cfg["n_sample"], cfg["radius"]

    pos = x_pad[:, :, :3]
    centroid = farthest_point_sample(pos, S)                   # (B, S, 3)
    idx = ball_query(centroid, pos, K, radius)                 # (B, S, K)
    padding = idx < 0
    idx0 = jnp.where(padding, 0, idx)

    grouped = jax.vmap(lambda xb, ib: xb[ib])(x_pad, idx0)     # (B, S, K, 128)
    # Subtract the centroid from the xyz lanes only: the padded centroid is
    # zero everywhere past lane 3, so a single broadcast subtract suffices.
    cent_pad = _pad_axis(centroid, -1, LANE)                   # (B, S, 128)
    grouped = grouped - cent_pad[:, :, None, :]
    # Same as the PyTorch module: zero padded slots before the MLP + max.
    grouped = jnp.where(padding[..., None], jnp.float32(0.0), grouped)

    feat = mlp_fn(grouped.reshape(B * S, K, LANE), weights, biases)  # (B*S, 128)
    feat = feat.reshape(B, S, LANE)
    # The kernel's last layer is column-shifted by 3, so lanes [0:3] come out
    # zero; writing the centroid there replaces the old slice/pad/concat path.
    return feat.at[:, :, :3].set(centroid)                     # (B, S, 128)


def pointnetpp_ssg_forward(x_pad, params, mlp_fn=mlp_max_pallas):
    for cfg, (ws, bs) in zip(SA_CONFIGS, params["sa"]):
        x_pad = set_abstraction_ssg(x_pad, ws, bs, cfg, mlp_fn)
    fws, fbs = params["final"]
    # Final MLPConv1D + max over the point dim: same "MLP then max" kernel,
    # with groups == batches and group-size == remaining points.
    # (B * S_last = 2 * 4 = 8 keeps rows a multiple of the 8-sublane granule.)
    out = mlp_fn(x_pad, fws, fbs)                              # (B, 128)
    return out[:, :FINAL_MLP_LAYERS[-1]]                       # single final slice


# ---------------------------------------------------------------------------
# Deterministic parameter init + kernel-layout padding
# ---------------------------------------------------------------------------
def _init_mlp(key, layers):
    ws, bs = [], []
    for cin, cout in zip(layers[:-1], layers[1:]):
        key, kw, kb = jax.random.split(key, 3)
        ws.append(jax.random.normal(kw, (cin, cout), jnp.float32) * (cin ** -0.5))
        bs.append(jax.random.normal(kb, (1, cout), jnp.float32) * 0.01)
    return key, ws, bs


def init_params(key):
    sa_params = []
    for cfg in SA_CONFIGS:
        layers = list(cfg["mlp_layers"][:-1]) + [cfg["mlp_layers"][-1] - 3]
        key, ws, bs = _init_mlp(key, layers)
        sa_params.append((ws, bs))
    key, fws, fbs = _init_mlp(key, FINAL_MLP_LAYERS)
    return {"sa": sa_params, "final": (fws, fbs)}


def _pad_weight(w, col_offset=0):
    cin, cout = w.shape
    rows = _round_up(max(cin, 1), LANE)
    cols = _round_up(cout + col_offset, LANE)
    assert rows == LANE and cols == LANE, (rows, cols)   # this config stays 128-wide
    out = jnp.zeros((rows, cols), w.dtype)
    return out.at[:cin, col_offset:col_offset + cout].set(w)


def _pad_bias(b, col_offset=0):
    cout = b.shape[1]
    cols = _round_up(cout + col_offset, LANE)
    out = jnp.zeros((1, cols), b.dtype)
    return out.at[0, col_offset:col_offset + cout].set(b[0])


def prepare_params(raw):
    """Zero-pad to (128,128)/(1,128), shift SA last layers by 3 columns
    (reserving lanes [0:3] for the centroid), and cast weights to bf16."""
    sa = []
    for ws, bs in raw["sa"]:
        pw, pb = [], []
        for li, (w, b) in enumerate(zip(ws, bs)):
            off = 3 if li == len(ws) - 1 else 0
            pw.append(_pad_weight(w, off).astype(jnp.bfloat16))
            pb.append(_pad_bias(b, off))
        sa.append((pw, pb))
    fws, fbs = raw["final"]
    pf_w = [_pad_weight(w).astype(jnp.bfloat16) for w in fws]
    pf_b = [_pad_bias(b) for b in fbs]
    return {"sa": sa, "final": (pf_w, pf_b)}


# ---------------------------------------------------------------------------
if __name__ == "__main__":
    key = jax.random.PRNGKey(0)
    kpos, kfeat, kparam = jax.random.split(key, 3)

    B, N, C_IN = 2, 64, 6
    pos = jax.random.uniform(kpos, (B, N, 3), jnp.float32)
    feats = jax.random.normal(kfeat, (B, N, C_IN - 3), jnp.float32)
    x = jnp.concatenate([pos, feats], axis=-1)                  # (2, 64, 6)
    x_pad = _pad_axis(x, -1, LANE)                              # (2, 64, 128) slab

    params = prepare_params(init_params(kparam))

    fwd = jax.jit(functools.partial(pointnetpp_ssg_forward, mlp_fn=mlp_max_pallas))
    out = jax.block_until_ready(fwd(x_pad, params))
    assert out.shape == (B, FINAL_MLP_LAYERS[-1]), out.shape

    # correctness check vs. a pure-JAX reference with the same bf16 precision
    ref = jax.block_until_ready(
        pointnetpp_ssg_forward(x_pad, params, mlp_fn=mlp_max_ref))
    assert jnp.allclose(out, ref, atol=1e-3, rtol=1e-3), \
        float(jnp.max(jnp.abs(out - ref)))

    print("KERNEL_OK")
</pallas_src>

<mosaic_0001>
module attributes {stable_mosaic.version = 11 : i64} {
  func.func @kernel(%arg0: i32, %arg1: memref<256x128xf32, #tpu.memory_space<vmem>>, %arg2: memref<128x128xbf16, #tpu.memory_space<vmem>>, %arg3: memref<1x128xf32, #tpu.memory_space<vmem>>, %arg4: memref<128x128xbf16, #tpu.memory_space<vmem>>, %arg5: memref<1x128xf32, #tpu.memory_space<vmem>>, %arg6: memref<32x128xf32, #tpu.memory_space<vmem>>) attributes {dimension_semantics = [#tpu.dimension_semantics<parallel>], iteration_bounds = array<i64: 1>, scalar_prefetch = 0 : i64, scratch_operands = 0 : i64, tpu.core_type = #tpu.core_type<tc>, window_params = [{transform_indices = @transform_0, window_bounds = array<i64: 256, 128>}, {pipeline_mode = #tpu.pipeline_mode<synchronous>, transform_indices = @transform_1, window_bounds = array<i64: 128, 128>}, {pipeline_mode = #tpu.pipeline_mode<synchronous>, transform_indices = @transform_2, window_bounds = array<i64: 1, 128>}, {pipeline_mode = #tpu.pipeline_mode<synchronous>, transform_indices = @transform_3, window_bounds = array<i64: 128, 128>}, {pipeline_mode = #tpu.pipeline_mode<synchronous>, transform_indices = @transform_4, window_bounds = array<i64: 1, 128>}, {transform_indices = @transform_5, window_bounds = array<i64: 32, 128>}]} {
    %c0 = arith.constant 0 : index
    %c0_0 = arith.constant 0 : index
    %0 = vector.load %arg1[%c0, %c0_0] : memref<256x128xf32, #tpu.memory_space<vmem>>, vector<256x128xf32>
    %c0_1 = arith.constant 0 : index
    %c0_2 = arith.constant 0 : index
    %1 = vector.load %arg2[%c0_1, %c0_2] : memref<128x128xbf16, #tpu.memory_space<vmem>>, vector<128x128xbf16>
    %c0_3 = arith.constant 0 : index
    %c0_4 = arith.constant 0 : index
    %2 = vector.load %arg3[%c0_3, %c0_4] : memref<1x128xf32, #tpu.memory_space<vmem>>, vector<1x128xf32>
    %3 = arith.truncf %0 : vector<256x128xf32> to vector<256x128xbf16>
    %cst = arith.constant dense<0.000000e+00> : vector<256x128xf32>
    %4 = tpu.matmul %3, %1, %cst {dimension_numbers = #tpu.dot_dimension_numbers<[1], [0], [0], [1], [0, 0, 1, 1], [], []>} : vector<256x128xbf16>, vector<128x128xbf16>, vector<256x128xf32> -> vector<256x128xf32>
    %5 = vector.broadcast %2 : vector<1x128xf32> to vector<256x128xf32>
    %6 = arith.addf %4, %5 : vector<256x128xf32>
    %cst_5 = arith.constant 0.000000e+00 : f32
    %7 = vector.broadcast %cst_5 : f32 to vector<256x128xf32>
    %8 = arith.maximumf %6, %7 : vector<256x128xf32>
    %c0_6 = arith.constant 0 : index
    %c0_7 = arith.constant 0 : index
    %9 = vector.load %arg4[%c0_6, %c0_7] : memref<128x128xbf16, #tpu.memory_space<vmem>>, vector<128x128xbf16>
    %c0_8 = arith.constant 0 : index
    %c0_9 = arith.constant 0 : index
    %10 = vector.load %arg5[%c0_8, %c0_9] : memref<1x128xf32, #tpu.memory_space<vmem>>, vector<1x128xf32>
    %11 = arith.truncf %8 : vector<256x128xf32> to vector<256x128xbf16>
    %cst_10 = arith.constant dense<0.000000e+00> : vector<256x128xf32>
    %12 = tpu.matmul %11, %9, %cst_10 {dimension_numbers = #tpu.dot_dimension_numbers<[1], [0], [0], [1], [0, 0, 1, 1], [], []>} : vector<256x128xbf16>, vector<128x128xbf16>, vector<256x128xf32> -> vector<256x128xf32>
    %13 = vector.broadcast %10 : vector<1x128xf32> to vector<256x128xf32>
    %14 = arith.addf %12, %13 : vector<256x128xf32>
    %cst_11 = arith.constant 0.000000e+00 : f32
    %15 = vector.broadcast %cst_11 : f32 to vector<256x128xf32>
    %16 = arith.maximumf %14, %15 : vector<256x128xf32>
    %17 = vector.shape_cast %16 : vector<256x128xf32> to vector<32x8x128xf32>
    %cst_12 = arith.constant dense<0xFF800000> : vector<32x128xf32>
    %18 = vector.multi_reduction <maximumf>, %17, %cst_12 [1] : vector<32x8x128xf32> to vector<32x128xf32>
    %c0_13 = arith.constant 0 : index
    %c0_14 = arith.constant 0 : index
    %19 = vector.load %arg6[%c0_13, %c0_14] : memref<32x128xf32, #tpu.memory_space<vmem>>, vector<32x128xf32>
    tpu.vector_store %arg6[%c0_13, %c0_14], %18 {strides = array<i32>} : memref<32x128xf32, #tpu.memory_space<vmem>>, vector<32x128xf32>,
    return
  }
  func.func @transform_0(%arg0: i32) -> (i32, i32) {
    %c0_i32 = arith.constant 0 : i32
    %c0_i32_0 = arith.constant 0 : i32
    return %arg0, %c0_i32 : i32, i32
  }
  func.func @transform_1(%arg0: i32) -> (i32, i32) {
    %c0_i32 = arith.constant 0 : i32
    %c0_i32_0 = arith.constant 0 : i32
    %c0_i32_1 = arith.constant 0 : i32
    return %c0_i32, %c0_i32_0 : i32, i32
  }
  func.func @transform_2(%arg0: i32) -> (i32, i32) {
    %c0_i32 = arith.constant 0 : i32
    %c0_i32_0 = arith.constant 0 : i32
    %c0_i32_1 = arith.constant 0 : i32
    return %c0_i32, %c0_i32_0 : i32, i32
  }
  func.func @transform_3(%arg0: i32) -> (i32, i32) {
    %c0_i32 = arith.constant 0 : i32
    %c0_i32_0 = arith.constant 0 : i32
    %c0_i32_1 = arith.constant 0 : i32
    return %c0_i32, %c0_i32_0 : i32, i32
  }
  func.func @transform_4(%arg0: i32) -> (i32, i32) {
    %c0_i32 = arith.constant 0 : i32
    %c0_i32_0 = arith.constant 0 : i32
    %c0_i32_1 = arith.constant 0 : i32
    return %c0_i32, %c0_i32_0 : i32, i32
  }
  func.func @transform_5(%arg0: i32) -> (i32, i32) {
    %c0_i32 = arith.constant 0 : i32
    %c0_i32_0 = arith.constant 0 : i32
    return %arg0, %c0_i32 : i32, i32
  }
}

module attributes {stable_mosaic.version = 11 : i64} {
  func.func @kernel(%arg0: i32, %arg1: memref<64x128xf32, #tpu.memory_space<vmem>>, %arg2: memref<128x128xbf16, #tpu.memory_space<vmem>>, %arg3: memref<1x128xf32, #tpu.memory_space<vmem>>, %arg4: memref<128x128xbf16, #tpu.memory_space<vmem>>, %arg5: memref<1x128xf32, #tpu.memory_space<vmem>>, %arg6: memref<8x128xf32, #tpu.memory_space<vmem>>) attributes {dimension_semantics = [#tpu.dimension_semantics<parallel>], iteration_bounds = array<i64: 1>, scalar_prefetch = 0 : i64, scratch_operands = 0 : i64, tpu.core_type = #tpu.core_type<tc>, window_params = [{transform_indices = @transform_0, window_bounds = array<i64: 64, 128>}, {pipeline_mode = #tpu.pipeline_mode<synchronous>, transform_indices = @transform_1, window_bounds = array<i64: 128, 128>}, {pipeline_mode = #tpu.pipeline_mode<synchronous>, transform_indices = @transform_2, window_bounds = array<i64: 1, 128>}, {pipeline_mode = #tpu.pipeline_mode<synchronous>, transform_indices = @transform_3, window_bounds = array<i64: 128, 128>}, {pipeline_mode = #tpu.pipeline_mode<synchronous>, transform_indices = @transform_4, window_bounds = array<i64: 1, 128>}, {transform_indices = @transform_5, window_bounds = array<i64: 8, 128>}]} {
    %c0 = arith.constant 0 : index
    %c0_0 = arith.constant 0 : index
    %0 = vector.load %arg1[%c0, %c0_0] : memref<64x128xf32, #tpu.memory_space<vmem>>, vector<64x128xf32>
    %c0_1 = arith.constant 0 : index
    %c0_2 = arith.constant 0 : index
    %1 = vector.load %arg2[%c0_1, %c0_2] : memref<128x128xbf16, #tpu.memory_space<vmem>>, vector<128x128xbf16>
    %c0_3 = arith.constant 0 : index
    %c0_4 = arith.constant 0 : index
    %2 = vector.load %arg3[%c0_3, %c0_4] : memref<1x128xf32, #tpu.memory_space<vmem>>, vector<1x128xf32>
    %3 = arith.truncf %0 : vector<64x128xf32> to vector<64x128xbf16>
    %cst = arith.constant dense<0.000000e+00> : vector<64x128xf32>
    %4 = tpu.matmul %3, %1, %cst {dimension_numbers = #tpu.dot_dimension_numbers<[1], [0], [0], [1], [0, 0, 1, 1], [], []>} : vector<64x128xbf16>, vector<128x128xbf16>, vector<64x128xf32> -> vector<64x128xf32>
    %5 = vector.broadcast %2 : vector<1x128xf32> to vector<64x128xf32>
    %6 = arith.addf %4, %5 : vector<64x128xf32>
    %cst_5 = arith.constant 0.000000e+00 : f32
    %7 = vector.broadcast %cst_5 : f32 to vector<64x128xf32>
    %8 = arith.maximumf %6, %7 : vector<64x128xf32>
    %c0_6 = arith.constant 0 : index
    %c0_7 = arith.constant 0 : index
    %9 = vector.load %arg4[%c0_6, %c0_7] : memref<128x128xbf16, #tpu.memory_space<vmem>>, vector<128x128xbf16>
    %c0_8 = arith.constant 0 : index
    %c0_9 = arith.constant 0 : index
    %10 = vector.load %arg5[%c0_8, %c0_9] : memref<1x128xf32, #tpu.memory_space<vmem>>, vector<1x128xf32>
    %11 = arith.truncf %8 : vector<64x128xf32> to vector<64x128xbf16>
    %cst_10 = arith.constant dense<0.000000e+00> : vector<64x128xf32>
    %12 = tpu.matmul %11, %9, %cst_10 {dimension_numbers = #tpu.dot_dimension_numbers<[1], [0], [0], [1], [0, 0, 1, 1], [], []>} : vector<64x128xbf16>, vector<128x128xbf16>, vector<64x128xf32> -> vector<64x128xf32>
    %13 = vector.broadcast %10 : vector<1x128xf32> to vector<64x128xf32>
    %14 = arith.addf %12, %13 : vector<64x128xf32>
    %cst_11 = arith.constant 0.000000e+00 : f32
    %15 = vector.broadcast %cst_11 : f32 to vector<64x128xf32>
    %16 = arith.maximumf %14, %15 : vector<64x128xf32>
    %17 = vector.shape_cast %16 : vector<64x128xf32> to vector<8x8x128xf32>
    %cst_12 = arith.constant dense<0xFF800000> : vector<8x128xf32>
    %18 = vector.multi_reduction <maximumf>, %17, %cst_12 [1] : vector<8x8x128xf32> to vector<8x128xf32>
    %c0_13 = arith.constant 0 : index
    %c0_14 = arith.constant 0 : index
    %19 = vector.load %arg6[%c0_13, %c0_14] : memref<8x128xf32, #tpu.memory_space<vmem>>, vector<8x128xf32>
    tpu.vector_store %arg6[%c0_13, %c0_14], %18 {strides = array<i32>} : memref<8x128xf32, #tpu.memory_space<vmem>>, vector<8x128xf32>,
    return
  }
  func.func @transform_0(%arg0: i32) -> (i32, i32) {
    %c0_i32 = arith.constant 0 : i32
    %c0_i32_0 = arith.constant 0 : i32
    return %arg0, %c0_i32 : i32, i32
  }
  func.func @transform_1(%arg0: i32) -> (i32, i32) {
    %c0_i32 = arith.constant 0 : i32
    %c0_i32_0 = arith.constant 0 : i32
    %c0_i32_1 = arith.constant 0 : i32
    return %c0_i32, %c0_i32_0 : i32, i32
  }
  func.func @transform_2(%arg0: i32) -> (i32, i32) {
    %c0_i32 = arith.constant 0 : i32
    %c0_i32_0 = arith.constant 0 : i32
    %c0_i32_1 = arith.constant 0 : i32
    return %c0_i32, %c0_i32_0 : i32, i32
  }
  func.func @transform_3(%arg0: i32) -> (i32, i32) {
    %c0_i32 = arith.constant 0 : i32
    %c0_i32_0 = arith.constant 0 : i32
    %c0_i32_1 = arith.constant 0 : i32
    return %c0_i32, %c0_i32_0 : i32, i32
  }
  func.func @transform_4(%arg0: i32) -> (i32, i32) {
    %c0_i32 = arith.constant 0 : i32
    %c0_i32_0 = arith.constant 0 : i32
    %c0_i32_1 = arith.constant 0 : i32
    return %c0_i32, %c0_i32_0 : i32, i32
  }
  func.func @transform_5(%arg0: i32) -> (i32, i32) {
    %c0_i32 = arith.constant 0 : i32
    %c0_i32_0 = arith.constant 0 : i32
    return %arg0, %c0_i32 : i32, i32
  }
}

module attributes {stable_mosaic.version = 11 : i64} {
  func.func @kernel(%arg0: i32, %arg1: memref<8x128xf32, #tpu.memory_space<vmem>>, %arg2: memref<128x128xbf16, #tpu.memory_space<vmem>>, %arg3: memref<1x128xf32, #tpu.memory_space<vmem>>, %arg4: memref<128x128xbf16, #tpu.memory_space<vmem>>, %arg5: memref<1x128xf32, #tpu.memory_space<vmem>>, %arg6: memref<2x128xf32, #tpu.memory_space<vmem>>) attributes {dimension_semantics = [#tpu.dimension_semantics<parallel>], iteration_bounds = array<i64: 1>, scalar_prefetch = 0 : i64, scratch_operands = 0 : i64, tpu.core_type = #tpu.core_type<tc>, window_params = [{transform_indices = @transform_0, window_bounds = array<i64: 8, 128>}, {pipeline_mode = #tpu.pipeline_mode<synchronous>, transform_indices = @transform_1, window_bounds = array<i64: 128, 128>}, {pipeline_mode = #tpu.pipeline_mode<synchronous>, transform_indices = @transform_2, window_bounds = array<i64: 1, 128>}, {pipeline_mode = #tpu.pipeline_mode<synchronous>, transform_indices = @transform_3, window_bounds = array<i64: 128, 128>}, {pipeline_mode = #tpu.pipeline_mode<synchronous>, transform_indices = @transform_4, window_bounds = array<i64: 1, 128>}, {transform_indices = @transform_5, window_bounds = array<i64: 2, 128>}]} {
    %c0 = arith.constant 0 : index
    %c0_0 = arith.constant 0 : index
    %0 = vector.load %arg1[%c0, %c0_0] : memref<8x128xf32, #tpu.memory_space<vmem>>, vector<8x128xf32>
    %c0_1 = arith.constant 0 : index
    %c0_2 = arith.constant 0 : index
    %1 = vector.load %arg2[%c0_1, %c0_2] : memref<128x128xbf16, #tpu.memory_space<vmem>>, vector<128x128xbf16>
    %c0_3 = arith.constant 0 : index
    %c0_4 = arith.constant 0 : index
    %2 = vector.load %arg3[%c0_3, %c0_4] : memref<1x128xf32, #tpu.memory_space<vmem>>, vector<1x128xf32>
    %3 = arith.truncf %0 : vector<8x128xf32> to vector<8x128xbf16>
    %cst = arith.constant dense<0.000000e+00> : vector<8x128xf32>
    %4 = tpu.matmul %3, %1, %cst {dimension_numbers = #tpu.dot_dimension_numbers<[1], [0], [0], [1], [0, 0, 1, 1], [], []>} : vector<8x128xbf16>, vector<128x128xbf16>, vector<8x128xf32> -> vector<8x128xf32>
    %5 = vector.broadcast %2 : vector<1x128xf32> to vector<8x128xf32>
    %6 = arith.addf %4, %5 : vector<8x128xf32>
    %cst_5 = arith.constant 0.000000e+00 : f32
    %7 = vector.broadcast %cst_5 : f32 to vector<8x128xf32>
    %8 = arith.maximumf %6, %7 : vector<8x128xf32>
    %c0_6 = arith.constant 0 : index
    %c0_7 = arith.constant 0 : index
    %9 = vector.load %arg4[%c0_6, %c0_7] : memref<128x128xbf16, #tpu.memory_space<vmem>>, vector<128x128xbf16>
    %c0_8 = arith.constant 0 : index
    %c0_9 = arith.constant 0 : index
    %10 = vector.load %arg5[%c0_8, %c0_9] : memref<1x128xf32, #tpu.memory_space<vmem>>, vector<1x128xf32>
    %11 = arith.truncf %8 : vector<8x128xf32> to vector<8x128xbf16>
    %cst_10 = arith.constant dense<0.000000e+00> : vector<8x128xf32>
    %12 = tpu.matmul %11, %9, %cst_10 {dimension_numbers = #tpu.dot_dimension_numbers<[1], [0], [0], [1], [0, 0, 1, 1], [], []>} : vector<8x128xbf16>, vector<128x128xbf16>, vector<8x128xf32> -> vector<8x128xf32>
    %13 = vector.broadcast %10 : vector<1x128xf32> to vector<8x128xf32>
    %14 = arith.addf %12, %13 : vector<8x128xf32>
    %cst_11 = arith.constant 0.000000e+00 : f32
    %15 = vector.broadcast %cst_11 : f32 to vector<8x128xf32>
    %16 = arith.maximumf %14, %15 : vector<8x128xf32>
    %17 = vector.shape_cast %16 : vector<8x128xf32> to vector<2x4x128xf32>
    %cst_12 = arith.constant dense<0xFF800000> : vector<2x128xf32>
    %18 = vector.multi_reduction <maximumf>, %17, %cst_12 [1] : vector<2x4x128xf32> to vector<2x128xf32>
    %c0_13 = arith.constant 0 : index
    %c0_14 = arith.constant 0 : index
    %19 = vector.load %arg6[%c0_13, %c0_14] : memref<2x128xf32, #tpu.memory_space<vmem>>, vector<2x128xf32>
    tpu.vector_store %arg6[%c0_13, %c0_14], %18 {strides = array<i32>} : memref<2x128xf32, #tpu.memory_space<vmem>>, vector<2x128xf32>,
    return
  }
  func.func @transform_0(%arg0: i32) -> (i32, i32) {
    %c0_i32 = arith.constant 0 : i32
    %c0_i32_0 = arith.constant 0 : i32
    return %arg0, %c0_i32 : i32, i32
  }
  func.func @transform_1(%arg0: i32) -> (i32, i32) {
    %c0_i32 = arith.constant 0 : i32
    %c0_i32_0 = arith.constant 0 : i32
    %c0_i32_1 = arith.constant 0 : i32
    return %c0_i32, %c0_i32_0 : i32, i32
  }
  func.func @transform_2(%arg0: i32) -> (i32, i32) {
    %c0_i32 = arith.constant 0 : i32
    %c0_i32_0 = arith.constant 0 : i32
    %c0_i32_1 = arith.constant 0 : i32
    return %c0_i32, %c0_i32_0 : i32, i32
  }
  func.func @transform_3(%arg0: i32) -> (i32, i32) {
    %c0_i32 = arith.constant 0 : i32
    %c0_i32_0 = arith.constant 0 : i32
    %c0_i32_1 = arith.constant 0 : i32
    return %c0_i32, %c0_i32_0 : i32, i32
  }
  func.func @transform_4(%arg0: i32) -> (i32, i32) {
    %c0_i32 = arith.constant 0 : i32
    %c0_i32_0 = arith.constant 0 : i32
    %c0_i32_1 = arith.constant 0 : i32
    return %c0_i32, %c0_i32_0 : i32, i32
  }
  func.func @transform_5(%arg0: i32) -> (i32, i32) {
    %c0_i32 = arith.constant 0 : i32
    %c0_i32_0 = arith.constant 0 : i32
    return %arg0, %c0_i32 : i32, i32
  }
}

</mosaic_0001>

<llo_original>
// kernel: custom-call.12
$region0: #{custom-call.12}
  %s0 = inlined_call_operand.vmem [shape: f32[2,64], index: 0, kind: output, shape index: {}]

// kernel: pointnetpp_ssg_forward.3
$region0: #{pointnetpp_ssg_forward.3}
  #allocation0 [shape = 'u32[]', space=smem, size = 0x4, offset = 0x4, fixed_abs, tag = 'smem constant byte address 0x4 - core index']
  #allocation1 [shape = 'u32[144,128]{1,0:T(1,128)}', space=vmem, size = 0x12000, scoped, tag = 'internal scratch']
  %s0 = inlined_call_operand.vmem [shape: f32[256,128], index: 0, kind: input, shape index: {}]
  %s1 = inlined_call_operand.vmem [shape: bf16[128,128], index: 1, kind: input, shape index: {}]
  %s2 = inlined_call_operand.vmem [shape: f32[1,128], index: 2, kind: input, shape index: {}]
  %s3 = inlined_call_operand.vmem [shape: bf16[128,128], index: 3, kind: input, shape index: {}]
  %s4 = inlined_call_operand.vmem [shape: f32[1,128], index: 4, kind: input, shape index: {}]
  %s5 = inlined_call_operand.vmem [shape: f32[32,128], index: 5, kind: output, shape index: {}]
  %s6 = sld [smem:[#allocation0]]
  $region30: #{pointnetpp_ssg_forward.3} parent=0
    _
  %s8 = ssub.s32 1, %s6
  %s9 = scalar_select 0, %s8, %s6
  // Predicated region
  $region2: #{pointnetpp_ssg_forward.3} parent=0 // pred_check
    _
  $region3: #{pointnetpp_ssg_forward.3} parent=0 // pred_check_branch
    %11 = sbr.rel (0) target = $region5
  $region4: #{pointnetpp_ssg_forward.3} parent=0 // pred_region
    _
  $region5: #{pointnetpp_ssg_forward.3} parent=0 // pred_fallthru
    _
  // Predicated region
  $region6: #{pointnetpp_ssg_forward.3} parent=0 // pred_check
    _
  $region7: #{pointnetpp_ssg_forward.3} parent=0 // pred_check_branch
    %13 = sbr.rel (0) target = $region9
  $region8: #{pointnetpp_ssg_forward.3} parent=0 // pred_region
    _
  $region9: #{pointnetpp_ssg_forward.3} parent=0 // pred_fallthru
    _
  // Predicated region
  $region10: #{pointnetpp_ssg_forward.3} parent=0 // pred_check
    _
  $region11: #{pointnetpp_ssg_forward.3} parent=0 // pred_check_branch
    %15 = sbr.rel (0) target = $region13
  $region12: #{pointnetpp_ssg_forward.3} parent=0 // pred_region
    _
  $region13: #{pointnetpp_ssg_forward.3} parent=0 // pred_fallthru
    _
  // Predicated region
  $region14: #{pointnetpp_ssg_forward.3} parent=0 // pred_check
    _
  $region15: #{pointnetpp_ssg_forward.3} parent=0 // pred_check_branch
    %17 = sbr.rel (0) target = $region17
  $region16: #{pointnetpp_ssg_forward.3} parent=0 // pred_region
    _
  $region17: #{pointnetpp_ssg_forward.3} parent=0 // pred_fallthru
    _
  // Predicated region
  $region18: #{pointnetpp_ssg_forward.3} parent=0 // pred_check
    _
  $region19: #{pointnetpp_ssg_forward.3} parent=0 // pred_check_branch
    %19 = sbr.rel (0) target = $region21
  $region20: #{pointnetpp_ssg_forward.3} parent=0 // pred_region
    _
  $region21: #{pointnetpp_ssg_forward.3} parent=0 // pred_fallthru
    _
  %v21 = vld [vmem:[%s0] sm:$0xff]
  %v22 = vld [vmem:[%s0 + $0x8] sm:$0xff]
  %v23 = vld [vmem:[%s0 + $0x10] sm:$0xff]
  %v24 = vld [vmem:[%s0 + $0x18] sm:$0xff]
  %v25 = vld [vmem:[%s0 + $0x20] sm:$0xff]
  %v26 = vld [vmem:[%s0 + $0x28] sm:$0xff]
  %v27 = vld [vmem:[%s0 + $0x30] sm:$0xff]
  %v28 = vld [vmem:[%s0 + $0x38] sm:$0xff]
  %v29 = vld [vmem:[%s0 + $0x40] sm:$0xff]
  %v30 = vld [vmem:[%s0 + $0x48] sm:$0xff]
  %v31 = vld [vmem:[%s0 + $0x50] sm:$0xff]
  %v32 = vld [vmem:[%s0 + $0x58] sm:$0xff]
  %v33 = vld [vmem:[%s0 + $0x60] sm:$0xff]
  %v34 = vld [vmem:[%s0 + $0x68] sm:$0xff]
  %v35 = vld [vmem:[%s0 + $0x70] sm:$0xff]
  %v36 = vld [vmem:[%s0 + $0x78] sm:$0xff]
  %v37 = vld [vmem:[%s0 + $0x80] sm:$0xff]
  %v38 = vld [vmem:[%s0 + $0x88] sm:$0xff]
  %v39 = vld [vmem:[%s0 + $0x90] sm:$0xff]
  %v40 = vld [vmem:[%s0 + $0x98] sm:$0xff]
  %v41 = vld [vmem:[%s0 + $0xa0] sm:$0xff]
  %v42 = vld [vmem:[%s0 + $0xa8] sm:$0xff]
  %v43 = vld [vmem:[%s0 + $0xb0] sm:$0xff]
  %v44 = vld [vmem:[%s0 + $0xb8] sm:$0xff]
  %v45 = vld [vmem:[%s0 + $0xc0] sm:$0xff]
  %v46 = vld [vmem:[%s0 + $0xc8] sm:$0xff]
  %v47 = vld [vmem:[%s0 + $0xd0] sm:$0xff]
  %v48 = vld [vmem:[%s0 + $0xd8] sm:$0xff]
  %v49 = vld [vmem:[%s0 + $0xe0] sm:$0xff]
  %v50 = vld [vmem:[%s0 + $0xe8] sm:$0xff]
  %v51 = vld [vmem:[%s0 + $0xf0] sm:$0xff]
  %v52 = vld [vmem:[%s0 + $0xf8] sm:$0xff]
  %v53 = vld [vmem:[%s1] sm:$0xf]
  %v54 = vld [vmem:[%s1 + $0x4] sm:$0xf]
  %v55 = vld [vmem:[%s1 + $0x8] sm:$0xf]
  %v56 = vld [vmem:[%s1 + $0xc] sm:$0xf]
  %v57 = vld [vmem:[%s1 + $0x10] sm:$0xf]
  %v58 = vld [vmem:[%s1 + $0x14] sm:$0xf]
  %v59 = vld [vmem:[%s1 + $0x18] sm:$0xf]
  %v60 = vld [vmem:[%s1 + $0x1c] sm:$0xf]
  %v61 = vld [vmem:[%s1 + $0x20] sm:$0xf]
  %v62 = vld [vmem:[%s1 + $0x24] sm:$0xf]
  %v63 = vld [vmem:[%s1 + $0x28] sm:$0xf]
  %v64 = vld [vmem:[%s1 + $0x2c] sm:$0xf]
  %v65 = vld [vmem:[%s1 + $0x30] sm:$0xf]
  %v66 = vld [vmem:[%s1 + $0x34] sm:$0xf]
  %v67 = vld [vmem:[%s1 + $0x38] sm:$0xf]
  %v68 = vld [vmem:[%s1 + $0x3c] sm:$0xf]
  %v69 = vld [vmem:[%s2] sm:$0x1]
  %v70 = vpack.c.bf16 %v22, %v21
  %v71 = vpack.c.bf16 %v24, %v23
  %v72 = vpack.c.bf16 %v26, %v25
  %v73 = vpack.c.bf16 %v28, %v27
  %v74 = vpack.c.bf16 %v30, %v29
  %v75 = vpack.c.bf16 %v32, %v31
  %v76 = vpack.c.bf16 %v34, %v33
  %v77 = vpack.c.bf16 %v36, %v35
  %v78 = vpack.c.bf16 %v38, %v37
  %v79 = vpack.c.bf16 %v40, %v39
  %v80 = vpack.c.bf16 %v42, %v41
  %v81 = vpack.c.bf16 %v44, %v43
  %v82 = vpack.c.bf16 %v46, %v45
  %v83 = vpack.c.bf16 %v48, %v47
  %v84 = vpack.c.bf16 %v50, %v49
  %v85 = vpack.c.bf16 %v52, %v51
  %v87 = vlaneseq
  %v88 = vshrl.u32 %v87, 7
  %v89 = vsub.s32 0, %v88
  %v90 = vrot.slane %v69, %v89
  %v108 = vunpack.c.l.b16 %v53
  %v109 = vunpack.c.l.b16 %v54
  %v110 = vunpack.c.l.b16 %v55
  %v111 = vunpack.c.l.b16 %v56
  %v112 = vunpack.c.l.b16 %v57
  %v113 = vunpack.c.l.b16 %v58
  %v114 = vunpack.c.l.b16 %v59
  %v115 = vunpack.c.l.b16 %v60
  %v116 = vunpack.c.l.b16 %v61
  %v117 = vunpack.c.l.b16 %v62
  %v118 = vunpack.c.l.b16 %v63
  %v119 = vunpack.c.l.b16 %v64
  %v120 = vunpack.c.l.b16 %v65
  %v121 = vunpack.c.l.b16 %v66
  %v122 = vunpack.c.l.b16 %v67
  %v123 = vunpack.c.l.b16 %v68
  %v124 = vpack.c.b16 %v109, %v108
  %v125 = vpack.c.b16 %v111, %v110
  %v126 = vpack.c.b16 %v113, %v112
  %v127 = vpack.c.b16 %v115, %v114
  %v128 = vpack.c.b16 %v117, %v116
  %v129 = vpack.c.b16 %v119, %v118
  %v130 = vpack.c.b16 %v121, %v120
  %v131 = vpack.c.b16 %v123, %v122
  %140 = vmatprep.subr.bf16.mxu0 0
  %141 = vmatpush1.bf16.msra.mxu0 %v131
  %142 = vmatprep.subr.bf16.mxu0 0
  %143 = vmatpush1.bf16.msra.mxu0 %v130
  %144 = vmatprep.subr.bf16.mxu0 0
  %145 = vmatpush1.bf16.msra.mxu0 %v129
  %146 = vmatprep.subr.bf16.mxu0 0
  %147 = vmatpush1.bf16.msra.mxu0 %v128
  %148 = vmatprep.subr.bf16.mxu0 0
  %149 = vmatpush1.bf16.msra.mxu0 %v127
  %150 = vmatprep.subr.bf16.mxu0 0
  %151 = vmatpush1.bf16.msra.mxu0 %v126
  %152 = vmatprep.subr.bf16.mxu0 0
  %153 = vmatpush1.bf16.msra.mxu0 %v125
  %154 = vmatprep.subr.bf16.mxu0 0
  %155 = vmatpush1.bf16.msra.mxu0 %v124
  %156 = vmatprep.subr.bf16.mxu0 0
  %157 = vmatpush2.bf16.msra.mxu0 0
  %158 = vmatprep.subr.bf16.mxu0 0
  %159 = vmatpush2.bf16.msra.mxu0 0
  %160 = vmatprep.subr.bf16.mxu0 0
  %161 = vmatpush2.bf16.msra.mxu0 0
  %162 = vmatprep.subr.bf16.mxu0 0
  %163 = vmatpush2.bf16.msra.mxu0 0
  %164 = vmatprep.subr.bf16.mxu0 0
  %165 = vmatpush2.bf16.msra.mxu0 0
  %166 = vmatprep.subr.bf16.mxu0 0
  %167 = vmatpush2.bf16.msra.mxu0 0
  %168 = vmatprep.subr.bf16.mxu0 0
  %169 = vmatpush2.bf16.msra.mxu0 0
  %170 = vmatprep.subr.bf16.mxu0 0
  %171 = vmatpush2.bf16.msra.mxu0 0
  %172 = vmatprep.mubr.bf16.mxu0 0
  %173 = vmatmul.mubr.bf16.gmra.mxu0 %v70
  %v174 = vpop.f32.mrf.mxu0
  %v175 = vadd.f32 %v90, %v174
  %v176 = vpop.f32.mrf.mxu0
  %v177 = vpop.f32.mrf.mxu0
  %v178 = vadd.f32 %v90, %v177
  %v179 = vpop.f32.mrf.mxu0
  %180 = vmatprep.mubr.bf16.mxu0 0
  %181 = vmatmul.mubr.bf16.gmra.mxu0 %v71
  %v182 = vpop.f32.mrf.mxu0
  %v183 = vadd.f32 %v90, %v182
  %v184 = vpop.f32.mrf.mxu0
  %v185 = vpop.f32.mrf.mxu0
  %v186 = vadd.f32 %v90, %v185
  %v187 = vpop.f32.mrf.mxu0
  %188 = vmatprep.mubr.bf16.mxu0 0
  %189 = vmatmul.mubr.bf16.gmra.mxu0 %v72
  %v190 = vpop.f32.mrf.mxu0
  %v191 = vadd.f32 %v90, %v190
  %v192 = vpop.f32.mrf.mxu0
  %v193 = vpop.f32.mrf.mxu0
  %v194 = vadd.f32 %v90, %v193
  %v195 = vpop.f32.mrf.mxu0
  %196 = vmatprep.mubr.bf16.mxu0 0
  %197 = vmatmul.mubr.bf16.gmra.mxu0 %v73
  %v198 = vpop.f32.mrf.mxu0
  %v199 = vadd.f32 %v90, %v198
  %v200 = vpop.f32.mrf.mxu0
  %v201 = vpop.f32.mrf.mxu0
  %v202 = vadd.f32 %v90, %v201
  %v203 = vpop.f32.mrf.mxu0
  %204 = vmatprep.mubr.bf16.mxu0 0
  %205 = vmatmul.mubr.bf16.gmra.mxu0 %v74
  %v206 = vpop.f32.mrf.mxu0
  %v207 = vadd.f32 %v90, %v206
  %v208 = vpop.f32.mrf.mxu0
  %v209 = vpop.f32.mrf.mxu0
  %v210 = vadd.f32 %v90, %v209
  %v211 = vpop.f32.mrf.mxu0
  %212 = vmatprep.mubr.bf16.mxu0 0
  %213 = vmatmul.mubr.bf16.gmra.mxu0 %v75
  %v214 = vpop.f32.mrf.mxu0
  %v215 = vadd.f32 %v90, %v214
  %v216 = vpop.f32.mrf.mxu0
  %v217 = vpop.f32.mrf.mxu0
  %v218 = vadd.f32 %v90, %v217
  %v219 = vpop.f32.mrf.mxu0
  %220 = vmatprep.mubr.bf16.mxu0 0
  %221 = vmatmul.mubr.bf16.gmra.mxu0 %v76
  %v222 = vpop.f32.mrf.mxu0
  %v223 = vadd.f32 %v90, %v222
  %v224 = vpop.f32.mrf.mxu0
  %v225 = vpop.f32.mrf.mxu0
  %v226 = vadd.f32 %v90, %v225
  %v227 = vpop.f32.mrf.mxu0
  %228 = vmatprep.mubr.bf16.mxu0 0
  %229 = vmatmul.mubr.bf16.gmra.mxu0 %v77
  %v230 = vpop.f32.mrf.mxu0
  %v231 = vadd.f32 %v90, %v230
  %v232 = vpop.f32.mrf.mxu0
  %v233 = vpop.f32.mrf.mxu0
  %v234 = vadd.f32 %v90, %v233
  %v235 = vpop.f32.mrf.mxu0
  %236 = vmatprep.mubr.bf16.mxu0 0
  %237 = vmatmul.mubr.bf16.gmra.mxu0 %v78
  %v238 = vpop.f32.mrf.mxu0
  %v239 = vadd.f32 %v90, %v238
  %v240 = vpop.f32.mrf.mxu0
  %v241 = vpop.f32.mrf.mxu0
  %v242 = vadd.f32 %v90, %v241
  %v243 = vpop.f32.mrf.mxu0
  %244 = vmatprep.mubr.bf16.mxu0 0
  %245 = vmatmul.mubr.bf16.gmra.mxu0 %v79
  %v246 = vpop.f32.mrf.mxu0
  %v247 = vadd.f32 %v90, %v246
  %v248 = vpop.f32.mrf.mxu0
  %v249 = vpop.f32.mrf.mxu0
  %v250 = vadd.f32 %v90, %v249
  %v251 = vpop.f32.mrf.mxu0
  %252 = vmatprep.mubr.bf16.mxu0 0
  %253 = vmatmul.mubr.bf16.gmra.mxu0 %v80
  %v254 = vpop.f32.mrf.mxu0
  %v255 = vadd.f32 %v90, %v254
  %v256 = vpop.f32.mrf.mxu0
  %v257 = vpop.f32.mrf.mxu0
  %v258 = vadd.f32 %v90, %v257
  %v259 = vpop.f32.mrf.mxu0
  %260 = vmatprep.mubr.bf16.mxu0 0
  %261 = vmatmul.mubr.bf16.gmra.mxu0 %v81
  %v262 = vpop.f32.mrf.mxu0
  %v263 = vadd.f32 %v90, %v262
  %v264 = vpop.f32.mrf.mxu0
  %v265 = vpop.f32.mrf.mxu0
  %v266 = vadd.f32 %v90, %v265
  %v267 = vpop.f32.mrf.mxu0
  %268 = vmatprep.mubr.bf16.mxu0 0
  %269 = vmatmul.mubr.bf16.gmra.mxu0 %v82
  %v270 = vpop.f32.mrf.mxu0
  %v271 = vadd.f32 %v90, %v270
  %v272 = vpop.f32.mrf.mxu0
  %v273 = vpop.f32.mrf.mxu0
  %v274 = vadd.f32 %v90, %v273
  %v275 = vpop.f32.mrf.mxu0
  %276 = vmatprep.mubr.bf16.mxu0 0
  %277 = vmatmul.mubr.bf16.gmra.mxu0 %v83
  %v278 = vpop.f32.mrf.mxu0
  %v279 = vadd.f32 %v90, %v278
  %v280 = vpop.f32.mrf.mxu0
  %v281 = vpop.f32.mrf.mxu0
  %v282 = vadd.f32 %v90, %v281
  %v283 = vpop.f32.mrf.mxu0
  %284 = vmatprep.mubr.bf16.mxu0 0
  %285 = vmatmul.mubr.bf16.gmra.mxu0 %v84
  %v286 = vpop.f32.mrf.mxu0
  %v287 = vadd.f32 %v90, %v286
  %v288 = vpop.f32.mrf.mxu0
  %v289 = vpop.f32.mrf.mxu0
  %v290 = vadd.f32 %v90, %v289
  %v291 = vpop.f32.mrf.mxu0
  %292 = vmatprep.mubr.bf16.mxu0 0
  %293 = vmatmul.mubr.bf16.gmra.mxu0 %v85
  %v294 = vpop.f32.mrf.mxu0
  %v295 = vadd.f32 %v90, %v294
  %v296 = vpop.f32.mrf.mxu0
  %v297 = vpop.f32.mrf.mxu0
  %v298 = vadd.f32 %v90, %v297
  %v299 = vpop.f32.mrf.mxu0
  %300 = vdwg.mxu0
  %v301 = vmax.f32 %v175, 0.0
  %v302 = vmax.f32 %v178, 0.0
  %v303 = vmax.f32 %v183, 0.0
  %v304 = vmax.f32 %v186, 0.0
  %v305 = vmax.f32 %v191, 0.0
  %v306 = vmax.f32 %v194, 0.0
  %v307 = vmax.f32 %v199, 0.0
  %v308 = vmax.f32 %v202, 0.0
  %v309 = vmax.f32 %v207, 0.0
  %v310 = vmax.f32 %v210, 0.0
  %v311 = vmax.f32 %v215, 0.0
  %v312 = vmax.f32 %v218, 0.0
  %v313 = vmax.f32 %v223, 0.0
  %v314 = vmax.f32 %v226, 0.0
  %v315 = vmax.f32 %v231, 0.0
  %v316 = vmax.f32 %v234, 0.0
  %v317 = vmax.f32 %v239, 0.0
  %v318 = vmax.f32 %v242, 0.0
  %v319 = vmax.f32 %v247, 0.0
  %v320 = vmax.f32 %v250, 0.0
  %v321 = vmax.f32 %v255, 0.0
  %v322 = vmax.f32 %v258, 0.0
  %v323 = vmax.f32 %v263, 0.0
  %v324 = vmax.f32 %v266, 0.0
  %v325 = vmax.f32 %v271, 0.0
  %v326 = vmax.f32 %v274, 0.0
  %v327 = vmax.f32 %v279, 0.0
  %v328 = vmax.f32 %v282, 0.0
  %v329 = vmax.f32 %v287, 0.0
  %v330 = vmax.f32 %v290, 0.0
  %v331 = vmax.f32 %v295, 0.0
  %v332 = vmax.f32 %v298, 0.0
  %v333 = vld [vmem:[%s3] sm:$0xf]
  %v334 = vld [vmem:[%s3 + $0x4] sm:$0xf]
  %v335 = vld [vmem:[%s3 + $0x8] sm:$0xf]
  %v336 = vld [vmem:[%s3 + $0xc] sm:$0xf]
  %v337 = vld [vmem:[%s3 + $0x10] sm:$0xf]
  %v338 = vld [vmem:[%s3 + $0x14] sm:$0xf]
  %v339 = vld [vmem:[%s3 + $0x18] sm:$0xf]
  %v340 = vld [vmem:[%s3 + $0x1c] sm:$0xf]
  %v341 = vld [vmem:[%s3 + $0x20] sm:$0xf]
  %v342 = vld [vmem:[%s3 + $0x24] sm:$0xf]
  %v343 = vld [vmem:[%s3 + $0x28] sm:$0xf]
  %v344 = vld [vmem:[%s3 + $0x2c] sm:$0xf]
  %v345 = vld [vmem:[%s3 + $0x30] sm:$0xf]
  %v346 = vld [vmem:[%s3 + $0x34] sm:$0xf]
  %v347 = vld [vmem:[%s3 + $0x38] sm:$0xf]
  %v348 = vld [vmem:[%s3 + $0x3c] sm:$0xf]
  %v349 = vld [vmem:[%s4] sm:$0x1]
  %v350 = vpack.c.bf16 %v302, %v301
  %v351 = vpack.c.bf16 %v304, %v303
  %v352 = vpack.c.bf16 %v306, %v305
  %v353 = vpack.c.bf16 %v308, %v307
  %v354 = vpack.c.bf16 %v310, %v309
  %v355 = vpack.c.bf16 %v312, %v311
  %v356 = vpack.c.bf16 %v314, %v313
  %v357 = vpack.c.bf16 %v316, %v315
  %v358 = vpack.c.bf16 %v318, %v317
  %v359 = vpack.c.bf16 %v320, %v319
  %v360 = vpack.c.bf16 %v322, %v321
  %v361 = vpack.c.bf16 %v324, %v323
  %v362 = vpack.c.bf16 %v326, %v325
  %v363 = vpack.c.bf16 %v328, %v327
  %v364 = vpack.c.bf16 %v330, %v329
  %v365 = vpack.c.bf16 %v332, %v331
  %v367 = vlaneseq
  %v368 = vshrl.u32 %v367, 7
  %v369 = vsub.s32 0, %v368
  %v370 = vrot.slane %v349, %v369
  %v388 = vunpack.c.l.b16 %v333
  %v389 = vunpack.c.l.b16 %v334
  %v390 = vunpack.c.l.b16 %v335
  %v391 = vunpack.c.l.b16 %v336
  %v392 = vunpack.c.l.b16 %v337
  %v393 = vunpack.c.l.b16 %v338
  %v394 = vunpack.c.l.b16 %v339
  %v395 = vunpack.c.l.b16 %v340
  %v396 = vunpack.c.l.b16 %v341
  %v397 = vunpack.c.l.b16 %v342
  %v398 = vunpack.c.l.b16 %v343
  %v399 = vunpack.c.l.b16 %v344
  %v400 = vunpack.c.l.b16 %v345
  %v401 = vunpack.c.l.b16 %v346
  %v402 = vunpack.c.l.b16 %v347
  %v403 = vunpack.c.l.b16 %v348
  %v404 = vpack.c.b16 %v389, %v388
  %v405 = vpack.c.b16 %v391, %v390
  %v406 = vpack.c.b16 %v393, %v392
  %v407 = vpack.c.b16 %v395, %v394
  %v408 = vpack.c.b16 %v397, %v396
  %v409 = vpack.c.b16 %v399, %v398
  %v410 = vpack.c.b16 %v401, %v400
  %v411 = vpack.c.b16 %v403, %v402
  %420 = vmatprep.subr.bf16.mxu0 0
  %421 = vmatpush1.bf16.msra.mxu0 %v411
  %422 = vmatprep.subr.bf16.mxu0 0
  %423 = vmatpush1.bf16.msra.mxu0 %v410
  %424 = vmatprep.subr.bf16.mxu0 0
  %425 = vmatpush1.bf16.msra.mxu0 %v409
  %426 = vmatprep.subr.bf16.mxu0 0
  %427 = vmatpush1.bf16.msra.mxu0 %v408
  %428 = vmatprep.subr.bf16.mxu0 0
  %429 = vmatpush1.bf16.msra.mxu0 %v407
  %430 = vmatprep.subr.bf16.mxu0 0
  %431 = vmatpush1.bf16.msra.mxu0 %v406
  %432 = vmatprep.subr.bf16.mxu0 0
  %433 = vmatpush1.bf16.msra.mxu0 %v405
  %434 = vmatprep.subr.bf16.mxu0 0
  %435 = vmatpush1.bf16.msra.mxu0 %v404
  %436 = vmatprep.subr.bf16.mxu0 0
  %437 = vmatpush2.bf16.msra.mxu0 0
  %438 = vmatprep.subr.bf16.mxu0 0
  %439 = vmatpush2.bf16.msra.mxu0 0
  %440 = vmatprep.subr.bf16.mxu0 0
  %441 = vmatpush2.bf16.msra.mxu0 0
  %442 = vmatprep.subr.bf16.mxu0 0
  %443 = vmatpush2.bf16.msra.mxu0 0
  %444 = vmatprep.subr.bf16.mxu0 0
  %445 = vmatpush2.bf16.msra.mxu0 0
  %446 = vmatprep.subr.bf16.mxu0 0
  %447 = vmatpush2.bf16.msra.mxu0 0
  %448 = vmatprep.subr.bf16.mxu0 0
  %449 = vmatpush2.bf16.msra.mxu0 0
  %450 = vmatprep.subr.bf16.mxu0 0
  %451 = vmatpush2.bf16.msra.mxu0 0
  %452 = vmatprep.mubr.bf16.mxu0 0
  %453 = vmatmul.mubr.bf16.gmra.mxu0 %v350
  %v454 = vpop.f32.mrf.mxu0
  %v455 = vadd.f32 %v370, %v454
  %v456 = vpop.f32.mrf.mxu0
  %v457 = vpop.f32.mrf.mxu0
  %v458 = vadd.f32 %v370, %v457
  %v459 = vpop.f32.mrf.mxu0
  %460 = vmatprep.mubr.bf16.mxu0 0
  %461 = vmatmul.mubr.bf16.gmra.mxu0 %v351
  %v462 = vpop.f32.mrf.mxu0
  %v463 = vadd.f32 %v370, %v462
  %v464 = vpop.f32.mrf.mxu0
  %v465 = vpop.f32.mrf.mxu0
  %v466 = vadd.f32 %v370, %v465
  %v467 = vpop.f32.mrf.mxu0
  %468 = vmatprep.mubr.bf16.mxu0 0
  %469 = vmatmul.mubr.bf16.gmra.mxu0 %v352
  %v470 = vpop.f32.mrf.mxu0
  %v471 = vadd.f32 %v370, %v470
  %v472 = vpop.f32.mrf.mxu0
  %v473 = vpop.f32.mrf.mxu0
  %v474 = vadd.f32 %v370, %v473
  %v475 = vpop.f32.mrf.mxu0
  %476 = vmatprep.mubr.bf16.mxu0 0
  %477 = vmatmul.mubr.bf16.gmra.mxu0 %v353
  %v478 = vpop.f32.mrf.mxu0
  %v479 = vadd.f32 %v370, %v478
  %v480 = vpop.f32.mrf.mxu0
  %v481 = vpop.f32.mrf.mxu0
  %v482 = vadd.f32 %v370, %v481
  %v483 = vpop.f32.mrf.mxu0
  %484 = vmatprep.mubr.bf16.mxu0 0
  %485 = vmatmul.mubr.bf16.gmra.mxu0 %v354
  %v486 = vpop.f32.mrf.mxu0
  %v487 = vadd.f32 %v370, %v486
  %v488 = vpop.f32.mrf.mxu0
  %v489 = vpop.f32.mrf.mxu0
  %v490 = vadd.f32 %v370, %v489
  %v491 = vpop.f32.mrf.mxu0
  %492 = vmatprep.mubr.bf16.mxu0 0
  %493 = vmatmul.mubr.bf16.gmra.mxu0 %v355
  %v494 = vpop.f32.mrf.mxu0
  %v495 = vadd.f32 %v370, %v494
  %v496 = vpop.f32.mrf.mxu0
  %v497 = vpop.f32.mrf.mxu0
  %v498 = vadd.f32 %v370, %v497
  %v499 = vpop.f32.mrf.mxu0
  %500 = vmatprep.mubr.bf16.mxu0 0
  %501 = vmatmul.mubr.bf16.gmra.mxu0 %v356
  %v502 = vpop.f32.mrf.mxu0
  %v503 = vadd.f32 %v370, %v502
  %v504 = vpop.f32.mrf.mxu0
  %v505 = vpop.f32.mrf.mxu0
  %v506 = vadd.f32 %v370, %v505
  %v507 = vpop.f32.mrf.mxu0
  %508 = vmatprep.mubr.bf16.mxu0 0
  %509 = vmatmul.mubr.bf16.gmra.mxu0 %v357
  %v510 = vpop.f32.mrf.mxu0
  %v511 = vadd.f32 %v370, %v510
  %v512 = vpop.f32.mrf.mxu0
  %v513 = vpop.f32.mrf.mxu0
  %v514 = vadd.f32 %v370, %v513
  %v515 = vpop.f32.mrf.mxu0
  %516 = vmatprep.mubr.bf16.mxu0 0
  %517 = vmatmul.mubr.bf16.gmra.mxu0 %v358
  %v518 = vpop.f32.mrf.mxu0
  %v519 = vadd.f32 %v370, %v518
  %v520 = vpop.f32.mrf.mxu0
  %v521 = vpop.f32.mrf.mxu0
  %v522 = vadd.f32 %v370, %v521
  %v523 = vpop.f32.mrf.mxu0
  %524 = vmatprep.mubr.bf16.mxu0 0
  %525 = vmatmul.mubr.bf16.gmra.mxu0 %v359
  %v526 = vpop.f32.mrf.mxu0
  %v527 = vadd.f32 %v370, %v526
  %v528 = vpop.f32.mrf.mxu0
  %v529 = vpop.f32.mrf.mxu0
  %v530 = vadd.f32 %v370, %v529
  %v531 = vpop.f32.mrf.mxu0
  %532 = vmatprep.mubr.bf16.mxu0 0
  %533 = vmatmul.mubr.bf16.gmra.mxu0 %v360
  %v534 = vpop.f32.mrf.mxu0
  %v535 = vadd.f32 %v370, %v534
  %v536 = vpop.f32.mrf.mxu0
  %v537 = vpop.f32.mrf.mxu0
  %v538 = vadd.f32 %v370, %v537
  %v539 = vpop.f32.mrf.mxu0
  %540 = vmatprep.mubr.bf16.mxu0 0
  %541 = vmatmul.mubr.bf16.gmra.mxu0 %v361
  %v542 = vpop.f32.mrf.mxu0
  %v543 = vadd.f32 %v370, %v542
  %v544 = vpop.f32.mrf.mxu0
  %v545 = vpop.f32.mrf.mxu0
  %v546 = vadd.f32 %v370, %v545
  %v547 = vpop.f32.mrf.mxu0
  %548 = vmatprep.mubr.bf16.mxu0 0
  %549 = vmatmul.mubr.bf16.gmra.mxu0 %v362
  %v550 = vpop.f32.mrf.mxu0
  %v551 = vadd.f32 %v370, %v550
  %v552 = vpop.f32.mrf.mxu0
  %v553 = vpop.f32.mrf.mxu0
  %v554 = vadd.f32 %v370, %v553
  %v555 = vpop.f32.mrf.mxu0
  %556 = vmatprep.mubr.bf16.mxu0 0
  %557 = vmatmul.mubr.bf16.gmra.mxu0 %v363
  %v558 = vpop.f32.mrf.mxu0
  %v559 = vadd.f32 %v370, %v558
  %v560 = vpop.f32.mrf.mxu0
  %v561 = vpop.f32.mrf.mxu0
  %v562 = vadd.f32 %v370, %v561
  %v563 = vpop.f32.mrf.mxu0
  %564 = vmatprep.mubr.bf16.mxu0 0
  %565 = vmatmul.mubr.bf16.gmra.mxu0 %v364
  %v566 = vpop.f32.mrf.mxu0
  %v567 = vadd.f32 %v370, %v566
  %v568 = vpop.f32.mrf.mxu0
  %v569 = vpop.f32.mrf.mxu0
  %v570 = vadd.f32 %v370, %v569
  %v571 = vpop.f32.mrf.mxu0
  %572 = vmatprep.mubr.bf16.mxu0 0
  %573 = vmatmul.mubr.bf16.gmra.mxu0 %v365
  %v574 = vpop.f32.mrf.mxu0
  %v575 = vadd.f32 %v370, %v574
  %v576 = vpop.f32.mrf.mxu0
  %v577 = vpop.f32.mrf.mxu0
  %v578 = vadd.f32 %v370, %v577
  %v579 = vpop.f32.mrf.mxu0
  %580 = vdwg.mxu0
  %v581 = vmax.f32 %v455, 0.0
  %v582 = vmax.f32 %v458, 0.0
  %v583 = vmax.f32 %v463, 0.0
  %v584 = vmax.f32 %v466, 0.0
  %v585 = vmax.f32 %v471, 0.0
  %v586 = vmax.f32 %v474, 0.0
  %v587 = vmax.f32 %v479, 0.0
  %v588 = vmax.f32 %v482, 0.0
  %v589 = vmax.f32 %v487, 0.0
  %v590 = vmax.f32 %v490, 0.0
  %v591 = vmax.f32 %v495, 0.0
  %v592 = vmax.f32 %v498, 0.0
  %v593 = vmax.f32 %v503, 0.0
  %v594 = vmax.f32 %v506, 0.0
  %v595 = vmax.f32 %v511, 0.0
  %v596 = vmax.f32 %v514, 0.0
  %v597 = vmax.f32 %v519, 0.0
  %v598 = vmax.f32 %v522, 0.0
  %v599 = vmax.f32 %v527, 0.0
  %v600 = vmax.f32 %v530, 0.0
  %v601 = vmax.f32 %v535, 0.0
  %v602 = vmax.f32 %v538, 0.0
  %v603 = vmax.f32 %v543, 0.0
  %v604 = vmax.f32 %v546, 0.0
  %v605 = vmax.f32 %v551, 0.0
  %v606 = vmax.f32 %v554, 0.0
  %v607 = vmax.f32 %v559, 0.0
  %v608 = vmax.f32 %v562, 0.0
  %v609 = vmax.f32 %v567, 0.0
  %v610 = vmax.f32 %v570, 0.0
  %v611 = vmax.f32 %v575, 0.0
  %v612 = vmax.f32 %v578, 0.0
  %v613 = vrot.slane %v581, 4
  %v614 = vmax.f32 %v581, %v613
  %v615 = vrot.slane %v614, 2
  %v616 = vmax.f32 %v614, %v615
  %v617 = vrot.slane %v616, 1
  %v618 = vmax.f32 %v616, %v617
  %v619 = vrot.slane %v582, 4
  %v620 = vmax.f32 %v582, %v619
  %v621 = vrot.slane %v620, 2
  %v622 = vmax.f32 %v620, %v621
  %v623 = vrot.slane %v622, 1
  %v624 = vmax.f32 %v622, %v623
  %v625 = vrot.slane %v583, 4
  %v626 = vmax.f32 %v583, %v625
  %v627 = vrot.slane %v626, 2
  %v628 = vmax.f32 %v626, %v627
  %v629 = vrot.slane %v628, 1
  %v630 = vmax.f32 %v628, %v629
  %v631 = vrot.slane %v584, 4
  %v632 = vmax.f32 %v584, %v631
  %v633 = vrot.slane %v632, 2
  %v634 = vmax.f32 %v632, %v633
  %v635 = vrot.slane %v634, 1
  %v636 = vmax.f32 %v634, %v635
  %v637 = vrot.slane %v585, 4
  %v638 = vmax.f32 %v585, %v637
  %v639 = vrot.slane %v638, 2
  %v640 = vmax.f32 %v638, %v639
  %v641 = vrot.slane %v640, 1
  %v642 = vmax.f32 %v640, %v641
  %v643 = vrot.slane %v586, 4
  %v644 = vmax.f32 %v586, %v643
  %v645 = vrot.slane %v644, 2
  %v646 = vmax.f32 %v644, %v645
  %v647 = vrot.slane %v646, 1
  %v648 = vmax.f32 %v646, %v647
  %v649 = vrot.slane %v587, 4
  %v650 = vmax.f32 %v587, %v649
  %v651 = vrot.slane %v650, 2
  %v652 = vmax.f32 %v650, %v651
  %v653 = vrot.slane %v652, 1
  %v654 = vmax.f32 %v652, %v653
  %v655 = vrot.slane %v588, 4
  %v656 = vmax.f32 %v588, %v655
  %v657 = vrot.slane %v656, 2
  %v658 = vmax.f32 %v656, %v657
  %v659 = vrot.slane %v658, 1
  %v660 = vmax.f32 %v658, %v659
  %v661 = vrot.slane %v589, 4
  %v662 = vmax.f32 %v589, %v661
  %v663 = vrot.slane %v662, 2
  %v664 = vmax.f32 %v662, %v663
  %v665 = vrot.slane %v664, 1
  %v666 = vmax.f32 %v664, %v665
  %v667 = vrot.slane %v590, 4
  %v668 = vmax.f32 %v590, %v667
  %v669 = vrot.slane %v668, 2
  %v670 = vmax.f32 %v668, %v669
  %v671 = vrot.slane %v670, 1
  %v672 = vmax.f32 %v670, %v671
  %v673 = vrot.slane %v591, 4
  %v674 = vmax.f32 %v591, %v673
  %v675 = vrot.slane %v674, 2
  %v676 = vmax.f32 %v674, %v675
  %v677 = vrot.slane %v676, 1
  %v678 = vmax.f32 %v676, %v677
  %v679 = vrot.slane %v592, 4
  %v680 = vmax.f32 %v592, %v679
  %v681 = vrot.slane %v680, 2
  %v682 = vmax.f32 %v680, %v681
  %v683 = vrot.slane %v682, 1
  %v684 = vmax.f32 %v682, %v683
  %v685 = vrot.slane %v593, 4
  %v686 = vmax.f32 %v593, %v685
  %v687 = vrot.slane %v686, 2
  %v688 = vmax.f32 %v686, %v687
  %v689 = vrot.slane %v688, 1
  %v690 = vmax.f32 %v688, %v689
  %v691 = vrot.slane %v594, 4
  %v692 = vmax.f32 %v594, %v691
  %v693 = vrot.slane %v692, 2
  %v694 = vmax.f32 %v692, %v693
  %v695 = vrot.slane %v694, 1
  %v696 = vmax.f32 %v694, %v695
  %v697 = vrot.slane %v595, 4
  %v698 = vmax.f32 %v595, %v697
  %v699 = vrot.slane %v698, 2
  %v700 = vmax.f32 %v698, %v699
  %v701 = vrot.slane %v700, 1
  %v702 = vmax.f32 %v700, %v701
  %v703 = vrot.slane %v596, 4
  %v704 = vmax.f32 %v596, %v703
  %v705 = vrot.slane %v704, 2
  %v706 = vmax.f32 %v704, %v705
  %v707 = vrot.slane %v706, 1
  %v708 = vmax.f32 %v706, %v707
  %v709 = vrot.slane %v597, 4
  %v710 = vmax.f32 %v597, %v709
  %v711 = vrot.slane %v710, 2
  %v712 = vmax.f32 %v710, %v711
  %v713 = vrot.slane %v712, 1
  %v714 = vmax.f32 %v712, %v713
  %v715 = vrot.slane %v598, 4
  %v716 = vmax.f32 %v598, %v715
  %v717 = vrot.slane %v716, 2
  %v718 = vmax.f32 %v716, %v717
  %v719 = vrot.slane %v718, 1
  %v720 = vmax.f32 %v718, %v719
  %v721 = vrot.slane %v599, 4
  %v722 = vmax.f32 %v599, %v721
  %v723 = vrot.slane %v722, 2
  %v724 = vmax.f32 %v722, %v723
  %v725 = vrot.slane %v724, 1
  %v726 = vmax.f32 %v724, %v725
  %v727 = vrot.slane %v600, 4
  %v728 = vmax.f32 %v600, %v727
  %v729 = vrot.slane %v728, 2
  %v730 = vmax.f32 %v728, %v729
  %v731 = vrot.slane %v730, 1
  %v732 = vmax.f32 %v730, %v731
  %v733 = vrot.slane %v601, 4
  %v734 = vmax.f32 %v601, %v733
  %v735 = vrot.slane %v734, 2
  %v736 = vmax.f32 %v734, %v735
  %v737 = vrot.slane %v736, 1
  %v738 = vmax.f32 %v736, %v737
  %v739 = vrot.slane %v602, 4
  %v740 = vmax.f32 %v602, %v739
  %v741 = vrot.slane %v740, 2
  %v742 = vmax.f32 %v740, %v741
  %v743 = vrot.slane %v742, 1
  %v744 = vmax.f32 %v742, %v743
  %v745 = vrot.slane %v603, 4
  %v746 = vmax.f32 %v603, %v745
  %v747 = vrot.slane %v746, 2
  %v748 = vmax.f32 %v746, %v747
  %v749 = vrot.slane %v748, 1
  %v750 = vmax.f32 %v748, %v749
  %v751 = vrot.slane %v604, 4
  %v752 = vmax.f32 %v604, %v751
  %v753 = vrot.slane %v752, 2
  %v754 = vmax.f32 %v752, %v753
  %v755 = vrot.slane %v754, 1
  %v756 = vmax.f32 %v754, %v755
  %v757 = vrot.slane %v605, 4
  %v758 = vmax.f32 %v605, %v757
  %v759 = vrot.slane %v758, 2
  %v760 = vmax.f32 %v758, %v759
  %v761 = vrot.slane %v760, 1
  %v762 = vmax.f32 %v760, %v761
  %v763 = vrot.slane %v606, 4
  %v764 = vmax.f32 %v606, %v763
  %v765 = vrot.slane %v764, 2
  %v766 = vmax.f32 %v764, %v765
  %v767 = vrot.slane %v766, 1
  %v768 = vmax.f32 %v766, %v767
  %v769 = vrot.slane %v607, 4
  %v770 = vmax.f32 %v607, %v769
  %v771 = vrot.slane %v770, 2
  %v772 = vmax.f32 %v770, %v771
  %v773 = vrot.slane %v772, 1
  %v774 = vmax.f32 %v772, %v773
  %v775 = vrot.slane %v608, 4
  %v776 = vmax.f32 %v608, %v775
  %v777 = vrot.slane %v776, 2
  %v778 = vmax.f32 %v776, %v777
  %v779 = vrot.slane %v778, 1
  %v780 = vmax.f32 %v778, %v779
  %v781 = vrot.slane %v609, 4
  %v782 = vmax.f32 %v609, %v781
  %v783 = vrot.slane %v782, 2
  %v784 = vmax.f32 %v782, %v783
  %v785 = vrot.slane %v784, 1
  %v786 = vmax.f32 %v784, %v785
  %v787 = vrot.slane %v610, 4
  %v788 = vmax.f32 %v610, %v787
  %v789 = vrot.slane %v788, 2
  %v790 = vmax.f32 %v788, %v789
  %v791 = vrot.slane %v790, 1
  %v792 = vmax.f32 %v790, %v791
  %v793 = vrot.slane %v611, 4
  %v794 = vmax.f32 %v611, %v793
  %v795 = vrot.slane %v794, 2
  %v796 = vmax.f32 %v794, %v795
  %v797 = vrot.slane %v796, 1
  %v798 = vmax.f32 %v796, %v797
  %v799 = vrot.slane %v612, 4
  %v800 = vmax.f32 %v612, %v799
  %v801 = vrot.slane %v800, 2
  %v802 = vmax.f32 %v800, %v801
  %v803 = vrot.slane %v802, 1
  %v804 = vmax.f32 %v802, %v803
  %vm837 = vcmask 1041409
  %v838 = vsel %vm837, %v624, %v618
  %vm839 = vcmask 1042434
  %v840 = vsel %vm839, %v630, %v838
  %vm841 = vcmask 1043459
  %v842 = vsel %vm841, %v636, %v840
  %vm843 = vcmask 1044484
  %v844 = vsel %vm843, %v642, %v842
  %vm845 = vcmask 1045509
  %v846 = vsel %vm845, %v648, %v844
  %vm847 = vcmask 1046534
  %v848 = vsel %vm847, %v654, %v846
  %vm849 = vcmask 1047559
  %v850 = vsel %vm849, %v660, %v848
  %v851 = vsel %vm837, %v672, %v666
  %v852 = vsel %vm839, %v678, %v851
  %v853 = vsel %vm841, %v684, %v852
  %v854 = vsel %vm843, %v690, %v853
  %v855 = vsel %vm845, %v696, %v854
  %v856 = vsel %vm847, %v702, %v855
  %v857 = vsel %vm849, %v708, %v856
  %v858 = vsel %vm837, %v720, %v714
  %v859 = vsel %vm839, %v726, %v858
  %v860 = vsel %vm841, %v732, %v859
  %v861 = vsel %vm843, %v738, %v860
  %v862 = vsel %vm845, %v744, %v861
  %v863 = vsel %vm847, %v750, %v862
  %v864 = vsel %vm849, %v756, %v863
  %v865 = vsel %vm837, %v768, %v762
  %v866 = vsel %vm839, %v774, %v865
  %v867 = vsel %vm841, %v780, %v866
  %v868 = vsel %vm843, %v786, %v867
  %v869 = vsel %vm845, %v792, %v868
  %v870 = vsel %vm847, %v798, %v869
  %v871 = vsel %vm849, %v804, %v870
  %876 = vst [vmem:[%s5] sm:$0xff] %v850
  %877 = vst [vmem:[%s5 + $0x8] sm:$0xff] %v857
  %878 = vst [vmem:[%s5 + $0x10] sm:$0xff] %v864
  %879 = vst [vmem:[%s5 + $0x18] sm:$0xff] %v871
  // Predicated region
  $region22: #{pointnetpp_ssg_forward.3} parent=0 // pred_check
    _
  $region23: #{pointnetpp_ssg_forward.3} parent=0 // pred_check_branch
    %881 = sbr.rel (0) target = $region25
  $region24: #{pointnetpp_ssg_forward.3} parent=0 // pred_region
    _
  $region25: #{pointnetpp_ssg_forward.3} parent=0 // pred_fallthru
    _
  // Predicated region
  $region26: #{pointnetpp_ssg_forward.3} parent=0 // pred_check
    _
  $region27: #{pointnetpp_ssg_forward.3} parent=0 // pred_check_branch
    %883 = sbr.rel (0) target = $region29
  $region28: #{pointnetpp_ssg_forward.3} parent=0 // pred_region
    _
  $region29: #{pointnetpp_ssg_forward.3} parent=0 // pred_fallthru
    _

// kernel: custom-call.13
$region0: #{custom-call.13}
  %s0 = inlined_call_operand.vmem [shape: f32[2,16], index: 0, kind: output, shape index: {}]

// kernel: pointnetpp_ssg_forward.4
$region0: #{pointnetpp_ssg_forward.4}
  #allocation0 [shape = 'u32[]', space=smem, size = 0x4, offset = 0x4, fixed_abs, tag = 'smem constant byte address 0x4 - core index']
  #allocation1 [shape = 'u32[144,128]{1,0:T(1,128)}', space=vmem, size = 0x12000, scoped, tag = 'internal scratch']
  %s0 = inlined_call_operand.vmem [shape: f32[64,128], index: 0, kind: input, shape index: {}]
  %s1 = inlined_call_operand.vmem [shape: bf16[128,128], index: 1, kind: input, shape index: {}]
  %s2 = inlined_call_operand.vmem [shape: f32[1,128], index: 2, kind: input, shape index: {}]
  %s3 = inlined_call_operand.vmem [shape: bf16[128,128], index: 3, kind: input, shape index: {}]
  %s4 = inlined_call_operand.vmem [shape: f32[1,128], index: 4, kind: input, shape index: {}]
  %s5 = inlined_call_operand.vmem [shape: f32[8,128], index: 5, kind: output, shape index: {}]
  %s6 = sld [smem:[#allocation0]]
  $region30: #{pointnetpp_ssg_forward.4} parent=0
    _
  %s8 = ssub.s32 1, %s6
  %s9 = scalar_select 0, %s8, %s6
  // Predicated region
  $region2: #{pointnetpp_ssg_forward.4} parent=0 // pred_check
    _
  $region3: #{pointnetpp_ssg_forward.4} parent=0 // pred_check_branch
    %11 = sbr.rel (0) target = $region5
  $region4: #{pointnetpp_ssg_forward.4} parent=0 // pred_region
    _
  $region5: #{pointnetpp_ssg_forward.4} parent=0 // pred_fallthru
    _
  // Predicated region
  $region6: #{pointnetpp_ssg_forward.4} parent=0 // pred_check
    _
  $region7: #{pointnetpp_ssg_forward.4} parent=0 // pred_check_branch
    %13 = sbr.rel (0) target = $region9
  $region8: #{pointnetpp_ssg_forward.4} parent=0 // pred_region
    _
  $region9: #{pointnetpp_ssg_forward.4} parent=0 // pred_fallthru
    _
  // Predicated region
  $region10: #{pointnetpp_ssg_forward.4} parent=0 // pred_check
    _
  $region11: #{pointnetpp_ssg_forward.4} parent=0 // pred_check_branch
    %15 = sbr.rel (0) target = $region13
  $region12: #{pointnetpp_ssg_forward.4} parent=0 // pred_region
    _
  $region13: #{pointnetpp_ssg_forward.4} parent=0 // pred_fallthru
    _
  // Predicated region
  $region14: #{pointnetpp_ssg_forward.4} parent=0 // pred_check
    _
  $region15: #{pointnetpp_ssg_forward.4} parent=0 // pred_check_branch
    %17 = sbr.rel (0) target = $region17
  $region16: #{pointnetpp_ssg_forward.4} parent=0 // pred_region
    _
  $region17: #{pointnetpp_ssg_forward.4} parent=0 // pred_fallthru
    _
  // Predicated region
  $region18: #{pointnetpp_ssg_forward.4} parent=0 // pred_check
    _
  $region19: #{pointnetpp_ssg_forward.4} parent=0 // pred_check_branch
    %19 = sbr.rel (0) target = $region21
  $region20: #{pointnetpp_ssg_forward.4} parent=0 // pred_region
    _
  $region21: #{pointnetpp_ssg_forward.4} parent=0 // pred_fallthru
    _
  %v21 = vld [vmem:[%s0] sm:$0xff]
  %v22 = vld [vmem:[%s0 + $0x8] sm:$0xff]
  %v23 = vld [vmem:[%s0 + $0x10] sm:$0xff]
  %v24 = vld [vmem:[%s0 + $0x18] sm:$0xff]
  %v25 = vld [vmem:[%s0 + $0x20] sm:$0xff]
  %v26 = vld [vmem:[%s0 + $0x28] sm:$0xff]
  %v27 = vld [vmem:[%s0 + $0x30] sm:$0xff]
  %v28 = vld [vmem:[%s0 + $0x38] sm:$0xff]
  %v29 = vld [vmem:[%s1] sm:$0xf]
  %v30 = vld [vmem:[%s1 + $0x4] sm:$0xf]
  %v31 = vld [vmem:[%s1 + $0x8] sm:$0xf]
  %v32 = vld [vmem:[%s1 + $0xc] sm:$0xf]
  %v33 = vld [vmem:[%s1 + $0x10] sm:$0xf]
  %v34 = vld [vmem:[%s1 + $0x14] sm:$0xf]
  %v35 = vld [vmem:[%s1 + $0x18] sm:$0xf]
  %v36 = vld [vmem:[%s1 + $0x1c] sm:$0xf]
  %v37 = vld [vmem:[%s1 + $0x20] sm:$0xf]
  %v38 = vld [vmem:[%s1 + $0x24] sm:$0xf]
  %v39 = vld [vmem:[%s1 + $0x28] sm:$0xf]
  %v40 = vld [vmem:[%s1 + $0x2c] sm:$0xf]
  %v41 = vld [vmem:[%s1 + $0x30] sm:$0xf]
  %v42 = vld [vmem:[%s1 + $0x34] sm:$0xf]
  %v43 = vld [vmem:[%s1 + $0x38] sm:$0xf]
  %v44 = vld [vmem:[%s1 + $0x3c] sm:$0xf]
  %v45 = vld [vmem:[%s2] sm:$0x1]
  %v46 = vpack.c.bf16 %v22, %v21
  %v47 = vpack.c.bf16 %v24, %v23
  %v48 = vpack.c.bf16 %v26, %v25
  %v49 = vpack.c.bf16 %v28, %v27
  %v51 = vlaneseq
  %v52 = vshrl.u32 %v51, 7
  %v53 = vsub.s32 0, %v52
  %v54 = vrot.slane %v45, %v53
  %v72 = vunpack.c.l.b16 %v29
  %v73 = vunpack.c.l.b16 %v30
  %v74 = vunpack.c.l.b16 %v31
  %v75 = vunpack.c.l.b16 %v32
  %v76 = vunpack.c.l.b16 %v33
  %v77 = vunpack.c.l.b16 %v34
  %v78 = vunpack.c.l.b16 %v35
  %v79 = vunpack.c.l.b16 %v36
  %v80 = vunpack.c.l.b16 %v37
  %v81 = vunpack.c.l.b16 %v38
  %v82 = vunpack.c.l.b16 %v39
  %v83 = vunpack.c.l.b16 %v40
  %v84 = vunpack.c.l.b16 %v41
  %v85 = vunpack.c.l.b16 %v42
  %v86 = vunpack.c.l.b16 %v43
  %v87 = vunpack.c.l.b16 %v44
  %v88 = vpack.c.b16 %v73, %v72
  %v89 = vpack.c.b16 %v75, %v74
  %v90 = vpack.c.b16 %v77, %v76
  %v91 = vpack.c.b16 %v79, %v78
  %v92 = vpack.c.b16 %v81, %v80
  %v93 = vpack.c.b16 %v83, %v82
  %v94 = vpack.c.b16 %v85, %v84
  %v95 = vpack.c.b16 %v87, %v86
  %104 = vmatprep.subr.bf16.mxu0 0
  %105 = vmatpush1.bf16.msra.mxu0 %v95
  %106 = vmatprep.subr.bf16.mxu0 0
  %107 = vmatpush1.bf16.msra.mxu0 %v94
  %108 = vmatprep.subr.bf16.mxu0 0
  %109 = vmatpush1.bf16.msra.mxu0 %v93
  %110 = vmatprep.subr.bf16.mxu0 0
  %111 = vmatpush1.bf16.msra.mxu0 %v92
  %112 = vmatprep.subr.bf16.mxu0 0
  %113 = vmatpush1.bf16.msra.mxu0 %v91
  %114 = vmatprep.subr.bf16.mxu0 0
  %115 = vmatpush1.bf16.msra.mxu0 %v90
  %116 = vmatprep.subr.bf16.mxu0 0
  %117 = vmatpush1.bf16.msra.mxu0 %v89
  %118 = vmatprep.subr.bf16.mxu0 0
  %119 = vmatpush1.bf16.msra.mxu0 %v88
  %120 = vmatprep.subr.bf16.mxu0 0
  %121 = vmatpush2.bf16.msra.mxu0 0
  %122 = vmatprep.subr.bf16.mxu0 0
  %123 = vmatpush2.bf16.msra.mxu0 0
  %124 = vmatprep.subr.bf16.mxu0 0
  %125 = vmatpush2.bf16.msra.mxu0 0
  %126 = vmatprep.subr.bf16.mxu0 0
  %127 = vmatpush2.bf16.msra.mxu0 0
  %128 = vmatprep.subr.bf16.mxu0 0
  %129 = vmatpush2.bf16.msra.mxu0 0
  %130 = vmatprep.subr.bf16.mxu0 0
  %131 = vmatpush2.bf16.msra.mxu0 0
  %132 = vmatprep.subr.bf16.mxu0 0
  %133 = vmatpush2.bf16.msra.mxu0 0
  %134 = vmatprep.subr.bf16.mxu0 0
  %135 = vmatpush2.bf16.msra.mxu0 0
  %136 = vmatprep.mubr.bf16.mxu0 0
  %137 = vmatmul.mubr.bf16.gmra.mxu0 %v46
  %v138 = vpop.f32.mrf.mxu0
  %v139 = vadd.f32 %v54, %v138
  %v140 = vpop.f32.mrf.mxu0
  %v141 = vpop.f32.mrf.mxu0
  %v142 = vadd.f32 %v54, %v141
  %v143 = vpop.f32.mrf.mxu0
  %144 = vmatprep.mubr.bf16.mxu0 0
  %145 = vmatmul.mubr.bf16.gmra.mxu0 %v47
  %v146 = vpop.f32.mrf.mxu0
  %v147 = vadd.f32 %v54, %v146
  %v148 = vpop.f32.mrf.mxu0
  %v149 = vpop.f32.mrf.mxu0
  %v150 = vadd.f32 %v54, %v149
  %v151 = vpop.f32.mrf.mxu0
  %152 = vmatprep.mubr.bf16.mxu0 0
  %153 = vmatmul.mubr.bf16.gmra.mxu0 %v48
  %v154 = vpop.f32.mrf.mxu0
  %v155 = vadd.f32 %v54, %v154
  %v156 = vpop.f32.mrf.mxu0
  %v157 = vpop.f32.mrf.mxu0
  %v158 = vadd.f32 %v54, %v157
  %v159 = vpop.f32.mrf.mxu0
  %160 = vmatprep.mubr.bf16.mxu0 0
  %161 = vmatmul.mubr.bf16.gmra.mxu0 %v49
  %v162 = vpop.f32.mrf.mxu0
  %v163 = vadd.f32 %v54, %v162
  %v164 = vpop.f32.mrf.mxu0
  %v165 = vpop.f32.mrf.mxu0
  %v166 = vadd.f32 %v54, %v165
  %v167 = vpop.f32.mrf.mxu0
  %168 = vdwg.mxu0
  %v169 = vmax.f32 %v139, 0.0
  %v170 = vmax.f32 %v142, 0.0
  %v171 = vmax.f32 %v147, 0.0
  %v172 = vmax.f32 %v150, 0.0
  %v173 = vmax.f32 %v155, 0.0
  %v174 = vmax.f32 %v158, 0.0
  %v175 = vmax.f32 %v163, 0.0
  %v176 = vmax.f32 %v166, 0.0
  %v177 = vld [vmem:[%s3] sm:$0xf]
  %v178 = vld [vmem:[%s3 + $0x4] sm:$0xf]
  %v179 = vld [vmem:[%s3 + $0x8] sm:$0xf]
  %v180 = vld [vmem:[%s3 + $0xc] sm:$0xf]
  %v181 = vld [vmem:[%s3 + $0x10] sm:$0xf]
  %v182 = vld [vmem:[%s3 + $0x14] sm:$0xf]
  %v183 = vld [vmem:[%s3 + $0x18] sm:$0xf]
  %v184 = vld [vmem:[%s3 + $0x1c] sm:$0xf]
  %v185 = vld [vmem:[%s3 + $0x20] sm:$0xf]
  %v186 = vld [vmem:[%s3 + $0x24] sm:$0xf]
  %v187 = vld [vmem:[%s3 + $0x28] sm:$0xf]
  %v188 = vld [vmem:[%s3 + $0x2c] sm:$0xf]
  %v189 = vld [vmem:[%s3 + $0x30] sm:$0xf]
  %v190 = vld [vmem:[%s3 + $0x34] sm:$0xf]
  %v191 = vld [vmem:[%s3 + $0x38] sm:$0xf]
  %v192 = vld [vmem:[%s3 + $0x3c] sm:$0xf]
  %v193 = vld [vmem:[%s4] sm:$0x1]
  %v194 = vpack.c.bf16 %v170, %v169
  %v195 = vpack.c.bf16 %v172, %v171
  %v196 = vpack.c.bf16 %v174, %v173
  %v197 = vpack.c.bf16 %v176, %v175
  %v199 = vlaneseq
  %v200 = vshrl.u32 %v199, 7
  %v201 = vsub.s32 0, %v200
  %v202 = vrot.slane %v193, %v201
  %v220 = vunpack.c.l.b16 %v177
  %v221 = vunpack.c.l.b16 %v178
  %v222 = vunpack.c.l.b16 %v179
  %v223 = vunpack.c.l.b16 %v180
  %v224 = vunpack.c.l.b16 %v181
  %v225 = vunpack.c.l.b16 %v182
  %v226 = vunpack.c.l.b16 %v183
  %v227 = vunpack.c.l.b16 %v184
  %v228 = vunpack.c.l.b16 %v185
  %v229 = vunpack.c.l.b16 %v186
  %v230 = vunpack.c.l.b16 %v187
  %v231 = vunpack.c.l.b16 %v188
  %v232 = vunpack.c.l.b16 %v189
  %v233 = vunpack.c.l.b16 %v190
  %v234 = vunpack.c.l.b16 %v191
  %v235 = vunpack.c.l.b16 %v192
  %v236 = vpack.c.b16 %v221, %v220
  %v237 = vpack.c.b16 %v223, %v222
  %v238 = vpack.c.b16 %v225, %v224
  %v239 = vpack.c.b16 %v227, %v226
  %v240 = vpack.c.b16 %v229, %v228
  %v241 = vpack.c.b16 %v231, %v230
  %v242 = vpack.c.b16 %v233, %v232
  %v243 = vpack.c.b16 %v235, %v234
  %252 = vmatprep.subr.bf16.mxu0 0
  %253 = vmatpush1.bf16.msra.mxu0 %v243
  %254 = vmatprep.subr.bf16.mxu0 0
  %255 = vmatpush1.bf16.msra.mxu0 %v242
  %256 = vmatprep.subr.bf16.mxu0 0
  %257 = vmatpush1.bf16.msra.mxu0 %v241
  %258 = vmatprep.subr.bf16.mxu0 0
  %259 = vmatpush1.bf16.msra.mxu0 %v240
  %260 = vmatprep.subr.bf16.mxu0 0
  %261 = vmatpush1.bf16.msra.mxu0 %v239
  %262 = vmatprep.subr.bf16.mxu0 0
  %263 = vmatpush1.bf16.msra.mxu0 %v238
  %264 = vmatprep.subr.bf16.mxu0 0
  %265 = vmatpush1.bf16.msra.mxu0 %v237
  %266 = vmatprep.subr.bf16.mxu0 0
  %267 = vmatpush1.bf16.msra.mxu0 %v236
  %268 = vmatprep.subr.bf16.mxu0 0
  %269 = vmatpush2.bf16.msra.mxu0 0
  %270 = vmatprep.subr.bf16.mxu0 0
  %271 = vmatpush2.bf16.msra.mxu0 0
  %272 = vmatprep.subr.bf16.mxu0 0
  %273 = vmatpush2.bf16.msra.mxu0 0
  %274 = vmatprep.subr.bf16.mxu0 0
  %275 = vmatpush2.bf16.msra.mxu0 0
  %276 = vmatprep.subr.bf16.mxu0 0
  %277 = vmatpush2.bf16.msra.mxu0 0
  %278 = vmatprep.subr.bf16.mxu0 0
  %279 = vmatpush2.bf16.msra.mxu0 0
  %280 = vmatprep.subr.bf16.mxu0 0
  %281 = vmatpush2.bf16.msra.mxu0 0
  %282 = vmatprep.subr.bf16.mxu0 0
  %283 = vmatpush2.bf16.msra.mxu0 0
  %284 = vmatprep.mubr.bf16.mxu0 0
  %285 = vmatmul.mubr.bf16.gmra.mxu0 %v194
  %v286 = vpop.f32.mrf.mxu0
  %v287 = vadd.f32 %v202, %v286
  %v288 = vpop.f32.mrf.mxu0
  %v289 = vpop.f32.mrf.mxu0
  %v290 = vadd.f32 %v202, %v289
  %v291 = vpop.f32.mrf.mxu0
  %292 = vmatprep.mubr.bf16.mxu0 0
  %293 = vmatmul.mubr.bf16.gmra.mxu0 %v195
  %v294 = vpop.f32.mrf.mxu0
  %v295 = vadd.f32 %v202, %v294
  %v296 = vpop.f32.mrf.mxu0
  %v297 = vpop.f32.mrf.mxu0
  %v298 = vadd.f32 %v202, %v297
  %v299 = vpop.f32.mrf.mxu0
  %300 = vmatprep.mubr.bf16.mxu0 0
  %301 = vmatmul.mubr.bf16.gmra.mxu0 %v196
  %v302 = vpop.f32.mrf.mxu0
  %v303 = vadd.f32 %v202, %v302
  %v304 = vpop.f32.mrf.mxu0
  %v305 = vpop.f32.mrf.mxu0
  %v306 = vadd.f32 %v202, %v305
  %v307 = vpop.f32.mrf.mxu0
  %308 = vmatprep.mubr.bf16.mxu0 0
  %309 = vmatmul.mubr.bf16.gmra.mxu0 %v197
  %v310 = vpop.f32.mrf.mxu0
  %v311 = vadd.f32 %v202, %v310
  %v312 = vpop.f32.mrf.mxu0
  %v313 = vpop.f32.mrf.mxu0
  %v314 = vadd.f32 %v202, %v313
  %v315 = vpop.f32.mrf.mxu0
  %316 = vdwg.mxu0
  %v317 = vmax.f32 %v287, 0.0
  %v318 = vmax.f32 %v290, 0.0
  %v319 = vmax.f32 %v295, 0.0
  %v320 = vmax.f32 %v298, 0.0
  %v321 = vmax.f32 %v303, 0.0
  %v322 = vmax.f32 %v306, 0.0
  %v323 = vmax.f32 %v311, 0.0
  %v324 = vmax.f32 %v314, 0.0
  %v325 = vrot.slane %v317, 4
  %v326 = vmax.f32 %v317, %v325
  %v327 = vrot.slane %v326, 2
  %v328 = vmax.f32 %v326, %v327
  %v329 = vrot.slane %v328, 1
  %v330 = vmax.f32 %v328, %v329
  %v331 = vrot.slane %v318, 4
  %v332 = vmax.f32 %v318, %v331
  %v333 = vrot.slane %v332, 2
  %v334 = vmax.f32 %v332, %v333
  %v335 = vrot.slane %v334, 1
  %v336 = vmax.f32 %v334, %v335
  %v337 = vrot.slane %v319, 4
  %v338 = vmax.f32 %v319, %v337
  %v339 = vrot.slane %v338, 2
  %v340 = vmax.f32 %v338, %v339
  %v341 = vrot.slane %v340, 1
  %v342 = vmax.f32 %v340, %v341
  %v343 = vrot.slane %v320, 4
  %v344 = vmax.f32 %v320, %v343
  %v345 = vrot.slane %v344, 2
  %v346 = vmax.f32 %v344, %v345
  %v347 = vrot.slane %v346, 1
  %v348 = vmax.f32 %v346, %v347
  %v349 = vrot.slane %v321, 4
  %v350 = vmax.f32 %v321, %v349
  %v351 = vrot.slane %v350, 2
  %v352 = vmax.f32 %v350, %v351
  %v353 = vrot.slane %v352, 1
  %v354 = vmax.f32 %v352, %v353
  %v355 = vrot.slane %v322, 4
  %v356 = vmax.f32 %v322, %v355
  %v357 = vrot.slane %v356, 2
  %v358 = vmax.f32 %v356, %v357
  %v359 = vrot.slane %v358, 1
  %v360 = vmax.f32 %v358, %v359
  %v361 = vrot.slane %v323, 4
  %v362 = vmax.f32 %v323, %v361
  %v363 = vrot.slane %v362, 2
  %v364 = vmax.f32 %v362, %v363
  %v365 = vrot.slane %v364, 1
  %v366 = vmax.f32 %v364, %v365
  %v367 = vrot.slane %v324, 4
  %v368 = vmax.f32 %v324, %v367
  %v369 = vrot.slane %v368, 2
  %v370 = vmax.f32 %v368, %v369
  %v371 = vrot.slane %v370, 1
  %v372 = vmax.f32 %v370, %v371
  %vm381 = vcmask 1041409
  %v382 = vsel %vm381, %v336, %v330
  %vm383 = vcmask 1042434
  %v384 = vsel %vm383, %v342, %v382
  %vm385 = vcmask 1043459
  %v386 = vsel %vm385, %v348, %v384
  %vm387 = vcmask 1044484
  %v388 = vsel %vm387, %v354, %v386
  %vm389 = vcmask 1045509
  %v390 = vsel %vm389, %v360, %v388
  %vm391 = vcmask 1046534
  %v392 = vsel %vm391, %v366, %v390
  %vm393 = vcmask 1047559
  %v394 = vsel %vm393, %v372, %v392
  %396 = vst [vmem:[%s5] sm:$0xff] %v394
  // Predicated region
  $region22: #{pointnetpp_ssg_forward.4} parent=0 // pred_check
    _
  $region23: #{pointnetpp_ssg_forward.4} parent=0 // pred_check_branch
    %398 = sbr.rel (0) target = $region25
  $region24: #{pointnetpp_ssg_forward.4} parent=0 // pred_region
    _
  $region25: #{pointnetpp_ssg_forward.4} parent=0 // pred_fallthru
    _
  // Predicated region
  $region26: #{pointnetpp_ssg_forward.4} parent=0 // pred_check
    _
  $region27: #{pointnetpp_ssg_forward.4} parent=0 // pred_check_branch
    %400 = sbr.rel (0) target = $region29
  $region28: #{pointnetpp_ssg_forward.4} parent=0 // pred_region
    _
  $region29: #{pointnetpp_ssg_forward.4} parent=0 // pred_fallthru
    _

// kernel: pointnetpp_ssg_forward.5
$region0: #{pointnetpp_ssg_forward.5}
  #allocation0 [shape = 'u32[]', space=smem, size = 0x4, offset = 0x4, fixed_abs, tag = 'smem constant byte address 0x4 - core index']
  #allocation1 [shape = 'u32[144,128]{1,0:T(1,128)}', space=vmem, size = 0x12000, scoped, tag = 'internal scratch']
  %s0 = inlined_call_operand.vmem [shape: f32[8,128], index: 0, kind: input, shape index: {}]
  %s1 = inlined_call_operand.vmem [shape: bf16[128,128], index: 1, kind: input, shape index: {}]
  %s2 = inlined_call_operand.vmem [shape: f32[1,128], index: 2, kind: input, shape index: {}]
  %s3 = inlined_call_operand.vmem [shape: bf16[128,128], index: 3, kind: input, shape index: {}]
  %s4 = inlined_call_operand.vmem [shape: f32[1,128], index: 4, kind: input, shape index: {}]
  %s5 = inlined_call_operand.hbm [shape: f32[2,128], index: 5, kind: output, shape index: {}]
  %s6 = sld [smem:[#allocation0]]
  $region30: #{pointnetpp_ssg_forward.5} parent=0
    _
  %s8 = ssub.s32 1, %s6
  %s9 = scalar_select 0, %s8, %s6
  $region1: #{pointnetpp_ssg_forward.5} parent=0
    #allocation2 [shape = 'u8[1024]{0}', space=vmem, size = 0x400, scoped, tag = 'output window, operand 0, single buffered']
    #allocation3 [shape = 's32[1]{0}', space=sflag, size = 0x4, scoped, tag = 'scoped memory for pointnetpp_ssg_forward.5']
    %10 = vsyncpa [#allocation3], 0
    // Predicated region
    $region2: #{pointnetpp_ssg_forward.5} parent=1 // pred_check
      _
    $region3: #{pointnetpp_ssg_forward.5} parent=1 // pred_check_branch
      %12 = sbr.rel (0) target = $region5
    $region4: #{pointnetpp_ssg_forward.5} parent=1 // pred_region
      _
    $region5: #{pointnetpp_ssg_forward.5} parent=1 // pred_fallthru
      _
    // Predicated region
    $region6: #{pointnetpp_ssg_forward.5} parent=1 // pred_check
      _
    $region7: #{pointnetpp_ssg_forward.5} parent=1 // pred_check_branch
      %14 = sbr.rel (0) target = $region9
    $region8: #{pointnetpp_ssg_forward.5} parent=1 // pred_region
      _
    $region9: #{pointnetpp_ssg_forward.5} parent=1 // pred_fallthru
      _
    // Predicated region
    $region10: #{pointnetpp_ssg_forward.5} parent=1 // pred_check
      _
    $region11: #{pointnetpp_ssg_forward.5} parent=1 // pred_check_branch
      %16 = sbr.rel (0) target = $region13
    $region12: #{pointnetpp_ssg_forward.5} parent=1 // pred_region
      _
    $region13: #{pointnetpp_ssg_forward.5} parent=1 // pred_fallthru
      _
    // Predicated region
    $region14: #{pointnetpp_ssg_forward.5} parent=1 // pred_check
      _
    $region15: #{pointnetpp_ssg_forward.5} parent=1 // pred_check_branch
      %18 = sbr.rel (0) target = $region17
    $region16: #{pointnetpp_ssg_forward.5} parent=1 // pred_region
      _
    $region17: #{pointnetpp_ssg_forward.5} parent=1 // pred_fallthru
      _
    // Predicated region
    $region18: #{pointnetpp_ssg_forward.5} parent=1 // pred_check
      _
    $region19: #{pointnetpp_ssg_forward.5} parent=1 // pred_check_branch
      %20 = sbr.rel (0) target = $region21
    $region20: #{pointnetpp_ssg_forward.5} parent=1 // pred_region
      _
    $region21: #{pointnetpp_ssg_forward.5} parent=1 // pred_fallthru
      _
    %v22 = vld [vmem:[%s0] sm:$0xff]
    %v23 = vld [vmem:[%s1] sm:$0xf]
    %v24 = vld [vmem:[%s1 + $0x4] sm:$0xf]
    %v25 = vld [vmem:[%s1 + $0x8] sm:$0xf]
    %v26 = vld [vmem:[%s1 + $0xc] sm:$0xf]
    %v27 = vld [vmem:[%s1 + $0x10] sm:$0xf]
    %v28 = vld [vmem:[%s1 + $0x14] sm:$0xf]
    %v29 = vld [vmem:[%s1 + $0x18] sm:$0xf]
    %v30 = vld [vmem:[%s1 + $0x1c] sm:$0xf]
    %v31 = vld [vmem:[%s1 + $0x20] sm:$0xf]
    %v32 = vld [vmem:[%s1 + $0x24] sm:$0xf]
    %v33 = vld [vmem:[%s1 + $0x28] sm:$0xf]
    %v34 = vld [vmem:[%s1 + $0x2c] sm:$0xf]
    %v35 = vld [vmem:[%s1 + $0x30] sm:$0xf]
    %v36 = vld [vmem:[%s1 + $0x34] sm:$0xf]
    %v37 = vld [vmem:[%s1 + $0x38] sm:$0xf]
    %v38 = vld [vmem:[%s1 + $0x3c] sm:$0xf]
    %v39 = vld [vmem:[%s2] sm:$0x1]
    %v40 = vpack.c.bf16 %v22, %v22
    %v42 = vlaneseq
    %v43 = vshrl.u32 %v42, 7
    %v44 = vsub.s32 0, %v43
    %v45 = vrot.slane %v39, %v44
    %v63 = vunpack.c.l.b16 %v23
    %v64 = vunpack.c.l.b16 %v24
    %v65 = vunpack.c.l.b16 %v25
    %v66 = vunpack.c.l.b16 %v26
    %v67 = vunpack.c.l.b16 %v27
    %v68 = vunpack.c.l.b16 %v28
    %v69 = vunpack.c.l.b16 %v29
    %v70 = vunpack.c.l.b16 %v30
    %v71 = vunpack.c.l.b16 %v31
    %v72 = vunpack.c.l.b16 %v32
    %v73 = vunpack.c.l.b16 %v33
    %v74 = vunpack.c.l.b16 %v34
    %v75 = vunpack.c.l.b16 %v35
    %v76 = vunpack.c.l.b16 %v36
    %v77 = vunpack.c.l.b16 %v37
    %v78 = vunpack.c.l.b16 %v38
    %v79 = vpack.c.b16 %v64, %v63
    %v80 = vpack.c.b16 %v66, %v65
    %v81 = vpack.c.b16 %v68, %v67
    %v82 = vpack.c.b16 %v70, %v69
    %v83 = vpack.c.b16 %v72, %v71
    %v84 = vpack.c.b16 %v74, %v73
    %v85 = vpack.c.b16 %v76, %v75
    %v86 = vpack.c.b16 %v78, %v77
    %95 = vmatprep.subr.bf16.mxu0 0
    %96 = vmatpush1.bf16.msra.mxu0 %v86
    %97 = vmatprep.subr.bf16.mxu0 0
    %98 = vmatpush1.bf16.msra.mxu0 %v85
    %99 = vmatprep.subr.bf16.mxu0 0
    %100 = vmatpush1.bf16.msra.mxu0 %v84
    %101 = vmatprep.subr.bf16.mxu0 0
    %102 = vmatpush1.bf16.msra.mxu0 %v83
    %103 = vmatprep.subr.bf16.mxu0 0
    %104 = vmatpush1.bf16.msra.mxu0 %v82
    %105 = vmatprep.subr.bf16.mxu0 0
    %106 = vmatpush1.bf16.msra.mxu0 %v81
    %107 = vmatprep.subr.bf16.mxu0 0
    %108 = vmatpush1.bf16.msra.mxu0 %v80
    %109 = vmatprep.subr.bf16.mxu0 0
    %110 = vmatpush1.bf16.msra.mxu0 %v79
    %111 = vmatprep.subr.bf16.mxu0 0
    %112 = vmatpush2.bf16.msra.mxu0 0
    %113 = vmatprep.subr.bf16.mxu0 0
    %114 = vmatpush2.bf16.msra.mxu0 0
    %115 = vmatprep.subr.bf16.mxu0 0
    %116 = vmatpush2.bf16.msra.mxu0 0
    %117 = vmatprep.subr.bf16.mxu0 0
    %118 = vmatpush2.bf16.msra.mxu0 0
    %119 = vmatprep.subr.bf16.mxu0 0
    %120 = vmatpush2.bf16.msra.mxu0 0
    %121 = vmatprep.subr.bf16.mxu0 0
    %122 = vmatpush2.bf16.msra.mxu0 0
    %123 = vmatprep.subr.bf16.mxu0 0
    %124 = vmatpush2.bf16.msra.mxu0 0
    %125 = vmatprep.subr.bf16.mxu0 0
    %126 = vmatpush2.bf16.msra.mxu0 0
    %127 = vmatprep.mubr.bf16.mxu0 0
    %128 = vmatmul.mubr.bf16.gmra.mxu0 %v40
    %v129 = vpop.f32.mrf.mxu0
    %v130 = vadd.f32 %v45, %v129
    %v131 = vpop.f32.mrf.mxu0
    %v132 = vpop.f32.mrf.mxu0
    %v133 = vpop.f32.mrf.mxu0
    %134 = vdwg.mxu0
    %v135 = vmax.f32 %v130, 0.0
    %v136 = vld [vmem:[%s3] sm:$0xf]
    %v137 = vld [vmem:[%s3 + $0x4] sm:$0xf]
    %v138 = vld [vmem:[%s3 + $0x8] sm:$0xf]
    %v139 = vld [vmem:[%s3 + $0xc] sm:$0xf]
    %v140 = vld [vmem:[%s3 + $0x10] sm:$0xf]
    %v141 = vld [vmem:[%s3 + $0x14] sm:$0xf]
    %v142 = vld [vmem:[%s3 + $0x18] sm:$0xf]
    %v143 = vld [vmem:[%s3 + $0x1c] sm:$0xf]
    %v144 = vld [vmem:[%s3 + $0x20] sm:$0xf]
    %v145 = vld [vmem:[%s3 + $0x24] sm:$0xf]
    %v146 = vld [vmem:[%s3 + $0x28] sm:$0xf]
    %v147 = vld [vmem:[%s3 + $0x2c] sm:$0xf]
    %v148 = vld [vmem:[%s3 + $0x30] sm:$0xf]
    %v149 = vld [vmem:[%s3 + $0x34] sm:$0xf]
    %v150 = vld [vmem:[%s3 + $0x38] sm:$0xf]
    %v151 = vld [vmem:[%s3 + $0x3c] sm:$0xf]
    %v152 = vld [vmem:[%s4] sm:$0x1]
    %v153 = vpack.c.bf16 %v135, %v135
    %v155 = vlaneseq
    %v156 = vshrl.u32 %v155, 7
    %v157 = vsub.s32 0, %v156
    %v158 = vrot.slane %v152, %v157
    %v176 = vunpack.c.l.b16 %v136
    %v177 = vunpack.c.l.b16 %v137
    %v178 = vunpack.c.l.b16 %v138
    %v179 = vunpack.c.l.b16 %v139
    %v180 = vunpack.c.l.b16 %v140
    %v181 = vunpack.c.l.b16 %v141
    %v182 = vunpack.c.l.b16 %v142
    %v183 = vunpack.c.l.b16 %v143
    %v184 = vunpack.c.l.b16 %v144
    %v185 = vunpack.c.l.b16 %v145
    %v186 = vunpack.c.l.b16 %v146
    %v187 = vunpack.c.l.b16 %v147
    %v188 = vunpack.c.l.b16 %v148
    %v189 = vunpack.c.l.b16 %v149
    %v190 = vunpack.c.l.b16 %v150
    %v191 = vunpack.c.l.b16 %v151
    %v192 = vpack.c.b16 %v177, %v176
    %v193 = vpack.c.b16 %v179, %v178
    %v194 = vpack.c.b16 %v181, %v180
    %v195 = vpack.c.b16 %v183, %v182
    %v196 = vpack.c.b16 %v185, %v184
    %v197 = vpack.c.b16 %v187, %v186
    %v198 = vpack.c.b16 %v189, %v188
    %v199 = vpack.c.b16 %v191, %v190
    %208 = vmatprep.subr.bf16.mxu0 0
    %209 = vmatpush1.bf16.msra.mxu0 %v199
    %210 = vmatprep.subr.bf16.mxu0 0
    %211 = vmatpush1.bf16.msra.mxu0 %v198
    %212 = vmatprep.subr.bf16.mxu0 0
    %213 = vmatpush1.bf16.msra.mxu0 %v197
    %214 = vmatprep.subr.bf16.mxu0 0
    %215 = vmatpush1.bf16.msra.mxu0 %v196
    %216 = vmatprep.subr.bf16.mxu0 0
    %217 = vmatpush1.bf16.msra.mxu0 %v195
    %218 = vmatprep.subr.bf16.mxu0 0
    %219 = vmatpush1.bf16.msra.mxu0 %v194
    %220 = vmatprep.subr.bf16.mxu0 0
    %221 = vmatpush1.bf16.msra.mxu0 %v193
    %222 = vmatprep.subr.bf16.mxu0 0
    %223 = vmatpush1.bf16.msra.mxu0 %v192
    %224 = vmatprep.subr.bf16.mxu0 0
    %225 = vmatpush2.bf16.msra.mxu0 0
    %226 = vmatprep.subr.bf16.mxu0 0
    %227 = vmatpush2.bf16.msra.mxu0 0
    %228 = vmatprep.subr.bf16.mxu0 0
    %229 = vmatpush2.bf16.msra.mxu0 0
    %230 = vmatprep.subr.bf16.mxu0 0
    %231 = vmatpush2.bf16.msra.mxu0 0
    %232 = vmatprep.subr.bf16.mxu0 0
    %233 = vmatpush2.bf16.msra.mxu0 0
    %234 = vmatprep.subr.bf16.mxu0 0
    %235 = vmatpush2.bf16.msra.mxu0 0
    %236 = vmatprep.subr.bf16.mxu0 0
    %237 = vmatpush2.bf16.msra.mxu0 0
    %238 = vmatprep.subr.bf16.mxu0 0
    %239 = vmatpush2.bf16.msra.mxu0 0
    %240 = vmatprep.mubr.bf16.mxu0 0
    %241 = vmatmul.mubr.bf16.gmra.mxu0 %v153
    %v242 = vpop.f32.mrf.mxu0
    %v243 = vadd.f32 %v158, %v242
    %v244 = vpop.f32.mrf.mxu0
    %v245 = vpop.f32.mrf.mxu0
    %v246 = vpop.f32.mrf.mxu0
    %247 = vdwg.mxu0
    %v248 = vmax.f32 %v243, 0.0
    %v250 = vcombine.high %v248, %v248
    %vm252 = vcmask 1043456
    %v253 = vsel %vm252, %v248, -inf
    %v254 = vrot.slane %v253, 4
    %v255 = vmax.f32 %v253, %v254
    %v256 = vrot.slane %v255, 2
    %v257 = vmax.f32 %v255, %v256
    %v258 = vrot.slane %v257, 1
    %v259 = vmax.f32 %v257, %v258
    %v260 = vsel %vm252, %v250, -inf
    %v261 = vrot.slane %v260, 4
    %v262 = vmax.f32 %v260, %v261
    %v263 = vrot.slane %v262, 2
    %v264 = vmax.f32 %v262, %v263
    %v265 = vrot.slane %v264, 1
    %v266 = vmax.f32 %v264, %v265
    %vm269 = vcmask 1041409
    %v270 = vsel %vm269, %v266, %v259
    %272 = vst [vmem:[#allocation2] sm:$0x3] %v270
    // Predicated region
    $region22: #{pointnetpp_ssg_forward.5} parent=1 // pred_check
      _
    $region23: #{pointnetpp_ssg_forward.5} parent=1 // pred_check_branch
      %274 = sbr.rel (0) target = $region25
    $region24: #{pointnetpp_ssg_forward.5} parent=1 // pred_region
      %s276 = ssub.s32 32, 32
      %277 = vsyncadd [#allocation3], %s276
      %s279 = sshll.u32 [#allocation2], 4
      %s280 = int_to_ptr.vmem [resolvable:$true] %s279
      %282 = dma.vmem_to_hbm [thread:$0]  %s280, 32, %s5, [#allocation3]
    $region25: #{pointnetpp_ssg_forward.5} parent=1 // pred_fallthru
      _
    // Predicated region
    $region26: #{pointnetpp_ssg_forward.5} parent=1 // pred_check
      _
    $region27: #{pointnetpp_ssg_forward.5} parent=1 // pred_check_branch
      %284 = sbr.rel (0) target = $region29
    $region28: #{pointnetpp_ssg_forward.5} parent=1 // pred_region
      %285 = dma.done [#allocation3], 32
    $region29: #{pointnetpp_ssg_forward.5} parent=1 // pred_fallthru
      _
    %286 = vsyncpa [#allocation3], 1

</llo_original>
